<compile_context>
chip_gen: v6e
topology: v6e:2x2x1
jax: 0.10.0
libtpu: 0.0.40
codegen_flags: <defaults>
</compile_context>

<pallas_src>
import jax
import jax.numpy as jnp
import numpy as np
from jax.experimental import pallas as pl
from jax.experimental.pallas import tpu as pltpu


def luong_decoder_seq_kernel(ids_ref,                               # SMEM scalar-prefetch: (T,) int32
                             emb_ref, enc_ref, enc_t_ref, h0_ref,   # VMEM-resident inputs
                             wih_ref, whh_ref, bcomb_ref, bhhn_ref,
                             wfc_ref, wch_ref, wcc_ref, bcls_ref,
                             out_ref):                               # (T, PACK) packed output
    T = out_ref.shape[0]
    H = h0_ref.shape[1]
    S = enc_ref.shape[0]

    # ---------- batched pre-pass (non-recurrent): embedding gather + input projection ----------
    # NOTE: no bounds check on token ids (out-of-range silently reads adjacent VMEM).
    rows = [emb_ref[pl.ds(ids_ref[t], 1), :] for t in range(T)]      # T x (1, H)
    x_all = jnp.concatenate(rows, axis=0)                            # (T, H)
    gi_all = jnp.dot(x_all, wih_ref[...],
                     preferred_element_type=jnp.float32) + bcomb_ref[...]   # (T, 3H), r/z biases pre-summed

    whh = whh_ref[...]                                               # (H, 3H)
    bhh_n = bhhn_ref[...]                                            # (1, H)   n-gate hidden bias

    # ---------- serial recurrence: only the h-dependent GRU half (fully unrolled) ----------
    h = h0_ref[...]                                                  # (1, H) register carry
    h_rows = []
    for t in range(T):
        gi = gi_all[t:t + 1, :]                                      # (1, 3H) static slice
        gh = jnp.dot(h, whh, preferred_element_type=jnp.float32)     # (1, 3H)
        r = jax.nn.sigmoid(gi[:, 0:H] + gh[:, 0:H])
        z = jax.nn.sigmoid(gi[:, H:2 * H] + gh[:, H:2 * H])
        n = jnp.tanh(gi[:, 2 * H:3 * H] + r * (gh[:, 2 * H:3 * H] + bhh_n))
        h = (1.0 - z) * n + z * h                                    # (1, H)
        h_rows.append(h)
    h_seq = jnp.concatenate(h_rows, axis=0)                          # (T, H)

    # ---------- batched post-pass (M = T matmuls) ----------
    # Luong 'general' attention: scores = h_seq @ (W_fc^T @ enc^T)
    a_mat = jnp.dot(wfc_ref[...], enc_t_ref[...],
                    preferred_element_type=jnp.float32)              # (H, S) loop-invariant
    scores = jnp.dot(h_seq, a_mat, preferred_element_type=jnp.float32)   # (T, S)
    m = jnp.max(scores, axis=1, keepdims=True)
    e = jnp.exp(scores - m)
    attw = e / jnp.sum(e, axis=1, keepdims=True)                     # (T, S) softmax

    # classifier split: concat([h, ctx]) @ W_cls^T == h @ Wc_h + attw @ (enc @ Wc_ctx)
    ec = jnp.dot(enc_ref[...], wcc_ref[...],
                 preferred_element_type=jnp.float32)                 # (S, V) loop-invariant
    logits = (jnp.dot(h_seq, wch_ref[...], preferred_element_type=jnp.float32)
              + jnp.dot(attw, ec, preferred_element_type=jnp.float32)
              + bcls_ref[...])                                       # (T, V)

    # log_softmax
    lm = jnp.max(logits, axis=1, keepdims=True)
    lse = lm + jnp.log(jnp.sum(jnp.exp(logits - lm), axis=1, keepdims=True))
    logp = logits - lse                                              # (T, V)

    # ---------- single lane-dense bulk store ----------
    V = logp.shape[1]
    pad = out_ref.shape[1] - (V + H + S)
    pieces = [logp, h_seq, attw]
    if pad:
        pieces.append(jnp.zeros((T, pad), jnp.float32))
    out_ref[...] = jnp.concatenate(pieces, axis=1)                   # (T, PACK)


def prepare_params(params):
    """One-time parameter preparation (transposes, bias pre-sum, classifier split)."""
    H = params["w_fc"].shape[0]
    b_ih = params["b_ih"]
    b_hh = params["b_hh"]
    w_cls = params["w_cls"]                                          # (V, 2H)
    b_comb = jnp.concatenate([b_ih[:2 * H] + b_hh[:2 * H], b_ih[2 * H:]]).reshape(1, 3 * H)
    return {
        "embedding": params["embedding"],                            # (V, H)
        "w_ih_t": params["w_ih"].T,                                  # (H, 3H)
        "w_hh_t": params["w_hh"].T,                                  # (H, 3H)
        "b_comb": b_comb,                                            # (1, 3H) r/z parts pre-summed
        "b_hh_n": b_hh[2 * H:].reshape(1, H),                        # (1, H)  n-gate hidden bias
        "w_fc_t": params["w_fc"].T,                                  # (H, H)  attention 'general'
        "w_cls_h": w_cls[:, :H].T,                                   # (H, V)  classifier (hidden half)
        "w_cls_ctx": w_cls[:, H:].T,                                 # (H, V)  classifier (context half)
        "b_cls": params["b_cls"].reshape(1, -1),                     # (1, V)
    }


@jax.jit
def luong_decode(token_ids, hidden, encoder_outputs, prep):
    """Run T chained decoder steps in ONE single-invocation pallas_call.

    token_ids:       (T,) int32.
    hidden:          (n_layers=1, 1, H) initial hidden state.
    encoder_outputs: (S, H).
    Returns (log_probs (T, V), final_hidden (1, 1, H), attn_weights (T, S)).
    """
    T = token_ids.shape[0]
    S, H = encoder_outputs.shape
    V = prep["w_cls_h"].shape[1]
    PACK = ((V + H + S + 127) // 128) * 128                          # lane-dense packed width
    h0 = hidden.reshape(1, H)
    enc_t = encoder_outputs.T                                        # (H, S) one-time, outside the kernel

    inv = lambda i, ids: (0, 0)                                      # grid-invariant (single DMA, resident)

    packed = pl.pallas_call(
        luong_decoder_seq_kernel,
        out_shape=jax.ShapeDtypeStruct((T, PACK), jnp.float32),
        grid_spec=pltpu.PrefetchScalarGridSpec(
            num_scalar_prefetch=1,                                   # token ids -> SMEM
            grid=(1,),                                               # whole decode in one invocation
            in_specs=[
                pl.BlockSpec(prep["embedding"].shape, inv),          # (V, H) embedding table
                pl.BlockSpec((S, H), inv),                           # encoder outputs
                pl.BlockSpec((H, S), inv),                           # encoder outputs, pre-transposed
                pl.BlockSpec((1, H), inv),                           # initial hidden
                pl.BlockSpec((H, 3 * H), inv),                       # W_ih^T
                pl.BlockSpec((H, 3 * H), inv),                       # W_hh^T
                pl.BlockSpec((1, 3 * H), inv),                       # combined input bias
                pl.BlockSpec((1, H), inv),                           # n-gate hidden bias
                pl.BlockSpec((H, H), inv),                           # attention fc W^T
                pl.BlockSpec((H, V), inv),                           # classifier W (hidden half)^T
                pl.BlockSpec((H, V), inv),                           # classifier W (context half)^T
                pl.BlockSpec((1, V), inv),                           # classifier bias
            ],
            out_specs=pl.BlockSpec((T, PACK), inv),
        ),
        compiler_params=pltpu.CompilerParams(
            dimension_semantics=("arbitrary",)),
    )(token_ids, prep["embedding"], encoder_outputs, enc_t, h0,
      prep["w_ih_t"], prep["w_hh_t"], prep["b_comb"], prep["b_hh_n"],
      prep["w_fc_t"], prep["w_cls_h"], prep["w_cls_ctx"], prep["b_cls"])

    log_probs = packed[:, :V]                                        # (T, V)
    h_seq = packed[:, V:V + H]                                       # (T, H)
    attw = packed[:, V + H:V + H + S]                                # (T, S)
    final_hidden = h_seq[-1].reshape(1, 1, H)
    return log_probs, final_hidden, attw


def luong_decoder_forward(input_idx, hidden, encoder_outputs, prep):
    """API parity with the PyTorch module's single-step forward (T=1)."""
    out, h_new, attw = luong_decode(input_idx.astype(jnp.int32).reshape(1),
                                    hidden, encoder_outputs, prep)
    return out, h_new, attw


# ----------------------------- pure-JAX reference (unfused, PyTorch-order math) -----------------------------
def reference_step(tok, hidden, enc, params):
    H = hidden.shape[-1]
    x = params["embedding"][tok].reshape(1, H)
    h = hidden.reshape(1, H)
    gi = x @ params["w_ih"].T + params["b_ih"]
    gh = h @ params["w_hh"].T + params["b_hh"]
    i_r, i_z, i_n = gi[:, :H], gi[:, H:2 * H], gi[:, 2 * H:]
    h_r, h_z, h_n = gh[:, :H], gh[:, H:2 * H], gh[:, 2 * H:]
    r = jax.nn.sigmoid(i_r + h_r)
    z = jax.nn.sigmoid(i_z + h_z)
    n = jnp.tanh(i_n + r * h_n)
    h_new = (1.0 - z) * n + z * h
    q = h_new @ params["w_fc"].T
    scores = (enc @ q.T).T                                           # (1, S)
    attw = jax.nn.softmax(scores, axis=1)
    ctx = attw @ enc                                                 # (1, H)
    feat = jnp.concatenate([h_new, ctx], axis=1)
    logits = feat @ params["w_cls"].T + params["b_cls"]
    out = jax.nn.log_softmax(logits, axis=1)
    return out, h_new.reshape(1, 1, H), attw


def reference_decode(token_ids, hidden, enc, params):
    outs, attws = [], []
    h = hidden
    for t in range(token_ids.shape[0]):
        o, h, a = reference_step(int(token_ids[t]), h, enc, params)
        outs.append(o)
        attws.append(a)
    return jnp.concatenate(outs, axis=0), h, jnp.concatenate(attws, axis=0)


if __name__ == "__main__":
    H = 32          # hidden_size
    V = 64          # output_size (vocab)
    S = 8           # encoder sequence length
    T = 6           # number of chained decoder steps fused into one launch
    N_LAYERS = 1

    key = jax.random.PRNGKey(0)
    ks = jax.random.split(key, 12)
    params = {
        "embedding": jax.random.normal(ks[0], (V, H), jnp.float32) * 0.1,
        "w_ih": jax.random.normal(ks[1], (3 * H, H), jnp.float32) * 0.1,
        "w_hh": jax.random.normal(ks[2], (3 * H, H), jnp.float32) * 0.1,
        "b_ih": jax.random.normal(ks[3], (3 * H,), jnp.float32) * 0.1,
        "b_hh": jax.random.normal(ks[4], (3 * H,), jnp.float32) * 0.1,
        "w_fc": jax.random.normal(ks[5], (H, H), jnp.float32) * 0.1,      # attention 'general'
        "w_cls": jax.random.normal(ks[6], (V, 2 * H), jnp.float32) * 0.1,
        "b_cls": jax.random.normal(ks[7], (V,), jnp.float32) * 0.1,
    }

    token_ids = jax.random.randint(ks[9], (T,), 0, V, dtype=jnp.int32)
    hidden = jax.random.normal(ks[8], (N_LAYERS, 1, H), jnp.float32) * 0.1
    encoder_outputs = jax.random.normal(ks[10], (S, H), jnp.float32) * 0.1

    prep = prepare_params(params)          # one-time: transposes / bias pre-sum / classifier split

    # Fused multi-step decode (single pallas_call invocation for all T steps).
    out, h_out, attw = luong_decode(token_ids, hidden, encoder_outputs, prep)
    jax.block_until_ready((out, h_out, attw))

    out_ref, h_ref, attw_ref = reference_decode(token_ids, hidden, encoder_outputs, params)
    assert out.shape == (T, V) and h_out.shape == (1, 1, H) and attw.shape == (T, S)
    np.testing.assert_allclose(np.asarray(out), np.asarray(out_ref), rtol=5e-5, atol=5e-5)
    np.testing.assert_allclose(np.asarray(h_out), np.asarray(h_ref), rtol=5e-5, atol=5e-5)
    np.testing.assert_allclose(np.asarray(attw), np.asarray(attw_ref), rtol=5e-5, atol=5e-5)

    # Single-step call (matches the original module's forward signature).
    out1, h1, attw1 = luong_decoder_forward(token_ids[:1], hidden, encoder_outputs, prep)
    jax.block_until_ready((out1, h1, attw1))
    out1_ref, h1_ref, attw1_ref = reference_step(int(token_ids[0]), hidden, encoder_outputs, params)
    assert out1.shape == (1, V) and h1.shape == (1, 1, H) and attw1.shape == (1, S)
    np.testing.assert_allclose(np.asarray(out1), np.asarray(out1_ref), rtol=5e-5, atol=5e-5)
    np.testing.assert_allclose(np.asarray(h1), np.asarray(h1_ref), rtol=5e-5, atol=5e-5)
    np.testing.assert_allclose(np.asarray(attw1), np.asarray(attw1_ref), rtol=5e-5, atol=5e-5)

    print("KERNEL_OK")
</pallas_src>

<mosaic_0001>
module attributes {stable_mosaic.version = 11 : i64} {
  func.func @luong_decoder_seq_kernel(%arg0: i32, %arg1: memref<6xi32, #tpu.memory_space<smem>>, %arg2: memref<64x32xf32, #tpu.memory_space<vmem>>, %arg3: memref<8x32xf32, #tpu.memory_space<vmem>>, %arg4: memref<32x8xf32, #tpu.memory_space<vmem>>, %arg5: memref<1x32xf32, #tpu.memory_space<vmem>>, %arg6: memref<32x96xf32, #tpu.memory_space<vmem>>, %arg7: memref<32x96xf32, #tpu.memory_space<vmem>>, %arg8: memref<1x96xf32, #tpu.memory_space<vmem>>, %arg9: memref<1x32xf32, #tpu.memory_space<vmem>>, %arg10: memref<32x32xf32, #tpu.memory_space<vmem>>, %arg11: memref<32x64xf32, #tpu.memory_space<vmem>>, %arg12: memref<32x64xf32, #tpu.memory_space<vmem>>, %arg13: memref<1x64xf32, #tpu.memory_space<vmem>>, %arg14: memref<6x128xf32, #tpu.memory_space<vmem>>) attributes {dimension_semantics = [#tpu.dimension_semantics<arbitrary>], iteration_bounds = array<i64: 1>, scalar_prefetch = 1 : i64, scratch_operands = 0 : i64, tpu.core_type = #tpu.core_type<tc>, window_params = [{pipeline_mode = #tpu.pipeline_mode<synchronous>, transform_indices = @transform_0, window_bounds = array<i64: 64, 32>}, {pipeline_mode = #tpu.pipeline_mode<synchronous>, transform_indices = @transform_1, window_bounds = array<i64: 8, 32>}, {pipeline_mode = #tpu.pipeline_mode<synchronous>, transform_indices = @transform_2, window_bounds = array<i64: 32, 8>}, {pipeline_mode = #tpu.pipeline_mode<synchronous>, transform_indices = @transform_3, window_bounds = array<i64: 1, 32>}, {pipeline_mode = #tpu.pipeline_mode<synchronous>, transform_indices = @transform_4, window_bounds = array<i64: 32, 96>}, {pipeline_mode = #tpu.pipeline_mode<synchronous>, transform_indices = @transform_5, window_bounds = array<i64: 32, 96>}, {pipeline_mode = #tpu.pipeline_mode<synchronous>, transform_indices = @transform_6, window_bounds = array<i64: 1, 96>}, {pipeline_mode = #tpu.pipeline_mode<synchronous>, transform_indices = @transform_7, window_bounds = array<i64: 1, 32>}, {pipeline_mode = #tpu.pipeline_mode<synchronous>, transform_indices = @transform_8, window_bounds = array<i64: 32, 32>}, {pipeline_mode = #tpu.pipeline_mode<synchronous>, transform_indices = @transform_9, window_bounds = array<i64: 32, 64>}, {pipeline_mode = #tpu.pipeline_mode<synchronous>, transform_indices = @transform_10, window_bounds = array<i64: 32, 64>}, {pipeline_mode = #tpu.pipeline_mode<synchronous>, transform_indices = @transform_11, window_bounds = array<i64: 1, 64>}, {pipeline_mode = #tpu.pipeline_mode<synchronous>, transform_indices = @transform_12, window_bounds = array<i64: 6, 128>}]} {
    %c0 = arith.constant 0 : index
    %0 = memref.load %arg1[%c0] : memref<6xi32, #tpu.memory_space<smem>>
    %1 = arith.index_cast %0 : i32 to index
    %c0_0 = arith.constant 0 : index
    %2 = vector.load %arg2[%1, %c0_0] : memref<64x32xf32, #tpu.memory_space<vmem>>, vector<1x32xf32>
    %c1 = arith.constant 1 : index
    %3 = memref.load %arg1[%c1] : memref<6xi32, #tpu.memory_space<smem>>
    %4 = arith.index_cast %3 : i32 to index
    %c0_1 = arith.constant 0 : index
    %5 = vector.load %arg2[%4, %c0_1] : memref<64x32xf32, #tpu.memory_space<vmem>>, vector<1x32xf32>
    %c2 = arith.constant 2 : index
    %6 = memref.load %arg1[%c2] : memref<6xi32, #tpu.memory_space<smem>>
    %7 = arith.index_cast %6 : i32 to index
    %c0_2 = arith.constant 0 : index
    %8 = vector.load %arg2[%7, %c0_2] : memref<64x32xf32, #tpu.memory_space<vmem>>, vector<1x32xf32>
    %c3 = arith.constant 3 : index
    %9 = memref.load %arg1[%c3] : memref<6xi32, #tpu.memory_space<smem>>
    %10 = arith.index_cast %9 : i32 to index
    %c0_3 = arith.constant 0 : index
    %11 = vector.load %arg2[%10, %c0_3] : memref<64x32xf32, #tpu.memory_space<vmem>>, vector<1x32xf32>
    %c4 = arith.constant 4 : index
    %12 = memref.load %arg1[%c4] : memref<6xi32, #tpu.memory_space<smem>>
    %13 = arith.index_cast %12 : i32 to index
    %c0_4 = arith.constant 0 : index
    %14 = vector.load %arg2[%13, %c0_4] : memref<64x32xf32, #tpu.memory_space<vmem>>, vector<1x32xf32>
    %c5 = arith.constant 5 : index
    %15 = memref.load %arg1[%c5] : memref<6xi32, #tpu.memory_space<smem>>
    %16 = arith.index_cast %15 : i32 to index
    %c0_5 = arith.constant 0 : index
    %17 = vector.load %arg2[%16, %c0_5] : memref<64x32xf32, #tpu.memory_space<vmem>>, vector<1x32xf32>
    %18 = tpu.concatenate %2, %5, %8, %11, %14, %17 in 0 : vector<1x32xf32>, vector<1x32xf32>, vector<1x32xf32>, vector<1x32xf32>, vector<1x32xf32>, vector<1x32xf32> -> vector<6x32xf32>
    %c0_6 = arith.constant 0 : index
    %c0_7 = arith.constant 0 : index
    %19 = vector.load %arg6[%c0_6, %c0_7] : memref<32x96xf32, #tpu.memory_space<vmem>>, vector<32x96xf32>
    %cst = arith.constant dense<0.000000e+00> : vector<6x96xf32>
    %20 = tpu.matmul %18, %19, %cst {dimension_numbers = #tpu.dot_dimension_numbers<[1], [0], [0], [1], [0, 0, 1, 1], [], []>} : vector<6x32xf32>, vector<32x96xf32>, vector<6x96xf32> -> vector<6x96xf32>
    %c0_8 = arith.constant 0 : index
    %c0_9 = arith.constant 0 : index
    %21 = vector.load %arg8[%c0_8, %c0_9] : memref<1x96xf32, #tpu.memory_space<vmem>>, vector<1x96xf32>
    %22 = vector.broadcast %21 : vector<1x96xf32> to vector<6x96xf32>
    %23 = arith.addf %20, %22 : vector<6x96xf32>
    %c0_10 = arith.constant 0 : index
    %c0_11 = arith.constant 0 : index
    %24 = vector.load %arg7[%c0_10, %c0_11] : memref<32x96xf32, #tpu.memory_space<vmem>>, vector<32x96xf32>
    %c0_12 = arith.constant 0 : index
    %c0_13 = arith.constant 0 : index
    %25 = vector.load %arg9[%c0_12, %c0_13] : memref<1x32xf32, #tpu.memory_space<vmem>>, vector<1x32xf32>
    %c0_14 = arith.constant 0 : index
    %c0_15 = arith.constant 0 : index
    %26 = vector.load %arg5[%c0_14, %c0_15] : memref<1x32xf32, #tpu.memory_space<vmem>>, vector<1x32xf32>
    %27 = vector.extract_strided_slice %23 {offsets = [0, 0], sizes = [1, 96], strides = [1, 1]} : vector<6x96xf32> to vector<1x96xf32>
    %cst_16 = arith.constant dense<0.000000e+00> : vector<1x96xf32>
    %28 = tpu.matmul %26, %24, %cst_16 {dimension_numbers = #tpu.dot_dimension_numbers<[1], [0], [0], [1], [0, 0, 1, 1], [], []>} : vector<1x32xf32>, vector<32x96xf32>, vector<1x96xf32> -> vector<1x96xf32>
    %29 = vector.extract_strided_slice %27 {offsets = [0, 0], sizes = [1, 32], strides = [1, 1]} : vector<1x96xf32> to vector<1x32xf32>
    %30 = vector.extract_strided_slice %28 {offsets = [0, 0], sizes = [1, 32], strides = [1, 1]} : vector<1x96xf32> to vector<1x32xf32>
    %31 = arith.addf %29, %30 : vector<1x32xf32>
    %32 = arith.negf %31 : vector<1x32xf32>
    %33 = math.exp %32 : vector<1x32xf32>
    %cst_17 = arith.constant 1.000000e+00 : f32
    %34 = vector.broadcast %cst_17 : f32 to vector<1x32xf32>
    %35 = arith.addf %34, %33 : vector<1x32xf32>
    %36 = arith.divf %34, %35 : vector<1x32xf32>
    %37 = vector.extract_strided_slice %27 {offsets = [0, 32], sizes = [1, 32], strides = [1, 1]} : vector<1x96xf32> to vector<1x32xf32>
    %38 = vector.extract_strided_slice %28 {offsets = [0, 32], sizes = [1, 32], strides = [1, 1]} : vector<1x96xf32> to vector<1x32xf32>
    %39 = arith.addf %37, %38 : vector<1x32xf32>
    %40 = arith.negf %39 : vector<1x32xf32>
    %41 = math.exp %40 : vector<1x32xf32>
    %cst_18 = arith.constant 1.000000e+00 : f32
    %42 = vector.broadcast %cst_18 : f32 to vector<1x32xf32>
    %43 = arith.addf %42, %41 : vector<1x32xf32>
    %44 = arith.divf %42, %43 : vector<1x32xf32>
    %45 = vector.extract_strided_slice %27 {offsets = [0, 64], sizes = [1, 32], strides = [1, 1]} : vector<1x96xf32> to vector<1x32xf32>
    %46 = vector.extract_strided_slice %28 {offsets = [0, 64], sizes = [1, 32], strides = [1, 1]} : vector<1x96xf32> to vector<1x32xf32>
    %47 = arith.addf %46, %25 : vector<1x32xf32>
    %48 = arith.mulf %36, %47 : vector<1x32xf32>
    %49 = arith.addf %45, %48 : vector<1x32xf32>
    %50 = math.tanh %49 : vector<1x32xf32>
    %cst_19 = arith.constant 1.000000e+00 : f32
    %51 = vector.broadcast %cst_19 : f32 to vector<1x32xf32>
    %52 = arith.subf %51, %44 : vector<1x32xf32>
    %53 = arith.mulf %52, %50 : vector<1x32xf32>
    %54 = arith.mulf %44, %26 : vector<1x32xf32>
    %55 = arith.addf %53, %54 : vector<1x32xf32>
    %56 = vector.extract_strided_slice %23 {offsets = [1, 0], sizes = [1, 96], strides = [1, 1]} : vector<6x96xf32> to vector<1x96xf32>
    %cst_20 = arith.constant dense<0.000000e+00> : vector<1x96xf32>
    %57 = tpu.matmul %55, %24, %cst_20 {dimension_numbers = #tpu.dot_dimension_numbers<[1], [0], [0], [1], [0, 0, 1, 1], [], []>} : vector<1x32xf32>, vector<32x96xf32>, vector<1x96xf32> -> vector<1x96xf32>
    %58 = vector.extract_strided_slice %56 {offsets = [0, 0], sizes = [1, 32], strides = [1, 1]} : vector<1x96xf32> to vector<1x32xf32>
    %59 = vector.extract_strided_slice %57 {offsets = [0, 0], sizes = [1, 32], strides = [1, 1]} : vector<1x96xf32> to vector<1x32xf32>
    %60 = arith.addf %58, %59 : vector<1x32xf32>
    %61 = arith.negf %60 : vector<1x32xf32>
    %62 = math.exp %61 : vector<1x32xf32>
    %cst_21 = arith.constant 1.000000e+00 : f32
    %63 = vector.broadcast %cst_21 : f32 to vector<1x32xf32>
    %64 = arith.addf %63, %62 : vector<1x32xf32>
    %65 = arith.divf %63, %64 : vector<1x32xf32>
    %66 = vector.extract_strided_slice %56 {offsets = [0, 32], sizes = [1, 32], strides = [1, 1]} : vector<1x96xf32> to vector<1x32xf32>
    %67 = vector.extract_strided_slice %57 {offsets = [0, 32], sizes = [1, 32], strides = [1, 1]} : vector<1x96xf32> to vector<1x32xf32>
    %68 = arith.addf %66, %67 : vector<1x32xf32>
    %69 = arith.negf %68 : vector<1x32xf32>
    %70 = math.exp %69 : vector<1x32xf32>
    %cst_22 = arith.constant 1.000000e+00 : f32
    %71 = vector.broadcast %cst_22 : f32 to vector<1x32xf32>
    %72 = arith.addf %71, %70 : vector<1x32xf32>
    %73 = arith.divf %71, %72 : vector<1x32xf32>
    %74 = vector.extract_strided_slice %56 {offsets = [0, 64], sizes = [1, 32], strides = [1, 1]} : vector<1x96xf32> to vector<1x32xf32>
    %75 = vector.extract_strided_slice %57 {offsets = [0, 64], sizes = [1, 32], strides = [1, 1]} : vector<1x96xf32> to vector<1x32xf32>
    %76 = arith.addf %75, %25 : vector<1x32xf32>
    %77 = arith.mulf %65, %76 : vector<1x32xf32>
    %78 = arith.addf %74, %77 : vector<1x32xf32>
    %79 = math.tanh %78 : vector<1x32xf32>
    %cst_23 = arith.constant 1.000000e+00 : f32
    %80 = vector.broadcast %cst_23 : f32 to vector<1x32xf32>
    %81 = arith.subf %80, %73 : vector<1x32xf32>
    %82 = arith.mulf %81, %79 : vector<1x32xf32>
    %83 = arith.mulf %73, %55 : vector<1x32xf32>
    %84 = arith.addf %82, %83 : vector<1x32xf32>
    %85 = vector.extract_strided_slice %23 {offsets = [2, 0], sizes = [1, 96], strides = [1, 1]} : vector<6x96xf32> to vector<1x96xf32>
    %cst_24 = arith.constant dense<0.000000e+00> : vector<1x96xf32>
    %86 = tpu.matmul %84, %24, %cst_24 {dimension_numbers = #tpu.dot_dimension_numbers<[1], [0], [0], [1], [0, 0, 1, 1], [], []>} : vector<1x32xf32>, vector<32x96xf32>, vector<1x96xf32> -> vector<1x96xf32>
    %87 = vector.extract_strided_slice %85 {offsets = [0, 0], sizes = [1, 32], strides = [1, 1]} : vector<1x96xf32> to vector<1x32xf32>
    %88 = vector.extract_strided_slice %86 {offsets = [0, 0], sizes = [1, 32], strides = [1, 1]} : vector<1x96xf32> to vector<1x32xf32>
    %89 = arith.addf %87, %88 : vector<1x32xf32>
    %90 = arith.negf %89 : vector<1x32xf32>
    %91 = math.exp %90 : vector<1x32xf32>
    %cst_25 = arith.constant 1.000000e+00 : f32
    %92 = vector.broadcast %cst_25 : f32 to vector<1x32xf32>
    %93 = arith.addf %92, %91 : vector<1x32xf32>
    %94 = arith.divf %92, %93 : vector<1x32xf32>
    %95 = vector.extract_strided_slice %85 {offsets = [0, 32], sizes = [1, 32], strides = [1, 1]} : vector<1x96xf32> to vector<1x32xf32>
    %96 = vector.extract_strided_slice %86 {offsets = [0, 32], sizes = [1, 32], strides = [1, 1]} : vector<1x96xf32> to vector<1x32xf32>
    %97 = arith.addf %95, %96 : vector<1x32xf32>
    %98 = arith.negf %97 : vector<1x32xf32>
    %99 = math.exp %98 : vector<1x32xf32>
    %cst_26 = arith.constant 1.000000e+00 : f32
    %100 = vector.broadcast %cst_26 : f32 to vector<1x32xf32>
    %101 = arith.addf %100, %99 : vector<1x32xf32>
    %102 = arith.divf %100, %101 : vector<1x32xf32>
    %103 = vector.extract_strided_slice %85 {offsets = [0, 64], sizes = [1, 32], strides = [1, 1]} : vector<1x96xf32> to vector<1x32xf32>
    %104 = vector.extract_strided_slice %86 {offsets = [0, 64], sizes = [1, 32], strides = [1, 1]} : vector<1x96xf32> to vector<1x32xf32>
    %105 = arith.addf %104, %25 : vector<1x32xf32>
    %106 = arith.mulf %94, %105 : vector<1x32xf32>
    %107 = arith.addf %103, %106 : vector<1x32xf32>
    %108 = math.tanh %107 : vector<1x32xf32>
    %cst_27 = arith.constant 1.000000e+00 : f32
    %109 = vector.broadcast %cst_27 : f32 to vector<1x32xf32>
    %110 = arith.subf %109, %102 : vector<1x32xf32>
    %111 = arith.mulf %110, %108 : vector<1x32xf32>
    %112 = arith.mulf %102, %84 : vector<1x32xf32>
    %113 = arith.addf %111, %112 : vector<1x32xf32>
    %114 = vector.extract_strided_slice %23 {offsets = [3, 0], sizes = [1, 96], strides = [1, 1]} : vector<6x96xf32> to vector<1x96xf32>
    %cst_28 = arith.constant dense<0.000000e+00> : vector<1x96xf32>
    %115 = tpu.matmul %113, %24, %cst_28 {dimension_numbers = #tpu.dot_dimension_numbers<[1], [0], [0], [1], [0, 0, 1, 1], [], []>} : vector<1x32xf32>, vector<32x96xf32>, vector<1x96xf32> -> vector<1x96xf32>
    %116 = vector.extract_strided_slice %114 {offsets = [0, 0], sizes = [1, 32], strides = [1, 1]} : vector<1x96xf32> to vector<1x32xf32>
    %117 = vector.extract_strided_slice %115 {offsets = [0, 0], sizes = [1, 32], strides = [1, 1]} : vector<1x96xf32> to vector<1x32xf32>
    %118 = arith.addf %116, %117 : vector<1x32xf32>
    %119 = arith.negf %118 : vector<1x32xf32>
    %120 = math.exp %119 : vector<1x32xf32>
    %cst_29 = arith.constant 1.000000e+00 : f32
    %121 = vector.broadcast %cst_29 : f32 to vector<1x32xf32>
    %122 = arith.addf %121, %120 : vector<1x32xf32>
    %123 = arith.divf %121, %122 : vector<1x32xf32>
    %124 = vector.extract_strided_slice %114 {offsets = [0, 32], sizes = [1, 32], strides = [1, 1]} : vector<1x96xf32> to vector<1x32xf32>
    %125 = vector.extract_strided_slice %115 {offsets = [0, 32], sizes = [1, 32], strides = [1, 1]} : vector<1x96xf32> to vector<1x32xf32>
    %126 = arith.addf %124, %125 : vector<1x32xf32>
    %127 = arith.negf %126 : vector<1x32xf32>
    %128 = math.exp %127 : vector<1x32xf32>
    %cst_30 = arith.constant 1.000000e+00 : f32
    %129 = vector.broadcast %cst_30 : f32 to vector<1x32xf32>
    %130 = arith.addf %129, %128 : vector<1x32xf32>
    %131 = arith.divf %129, %130 : vector<1x32xf32>
    %132 = vector.extract_strided_slice %114 {offsets = [0, 64], sizes = [1, 32], strides = [1, 1]} : vector<1x96xf32> to vector<1x32xf32>
    %133 = vector.extract_strided_slice %115 {offsets = [0, 64], sizes = [1, 32], strides = [1, 1]} : vector<1x96xf32> to vector<1x32xf32>
    %134 = arith.addf %133, %25 : vector<1x32xf32>
    %135 = arith.mulf %123, %134 : vector<1x32xf32>
    %136 = arith.addf %132, %135 : vector<1x32xf32>
    %137 = math.tanh %136 : vector<1x32xf32>
    %cst_31 = arith.constant 1.000000e+00 : f32
    %138 = vector.broadcast %cst_31 : f32 to vector<1x32xf32>
    %139 = arith.subf %138, %131 : vector<1x32xf32>
    %140 = arith.mulf %139, %137 : vector<1x32xf32>
    %141 = arith.mulf %131, %113 : vector<1x32xf32>
    %142 = arith.addf %140, %141 : vector<1x32xf32>
    %143 = vector.extract_strided_slice %23 {offsets = [4, 0], sizes = [1, 96], strides = [1, 1]} : vector<6x96xf32> to vector<1x96xf32>
    %cst_32 = arith.constant dense<0.000000e+00> : vector<1x96xf32>
    %144 = tpu.matmul %142, %24, %cst_32 {dimension_numbers = #tpu.dot_dimension_numbers<[1], [0], [0], [1], [0, 0, 1, 1], [], []>} : vector<1x32xf32>, vector<32x96xf32>, vector<1x96xf32> -> vector<1x96xf32>
    %145 = vector.extract_strided_slice %143 {offsets = [0, 0], sizes = [1, 32], strides = [1, 1]} : vector<1x96xf32> to vector<1x32xf32>
    %146 = vector.extract_strided_slice %144 {offsets = [0, 0], sizes = [1, 32], strides = [1, 1]} : vector<1x96xf32> to vector<1x32xf32>
    %147 = arith.addf %145, %146 : vector<1x32xf32>
    %148 = arith.negf %147 : vector<1x32xf32>
    %149 = math.exp %148 : vector<1x32xf32>
    %cst_33 = arith.constant 1.000000e+00 : f32
    %150 = vector.broadcast %cst_33 : f32 to vector<1x32xf32>
    %151 = arith.addf %150, %149 : vector<1x32xf32>
    %152 = arith.divf %150, %151 : vector<1x32xf32>
    %153 = vector.extract_strided_slice %143 {offsets = [0, 32], sizes = [1, 32], strides = [1, 1]} : vector<1x96xf32> to vector<1x32xf32>
    %154 = vector.extract_strided_slice %144 {offsets = [0, 32], sizes = [1, 32], strides = [1, 1]} : vector<1x96xf32> to vector<1x32xf32>
    %155 = arith.addf %153, %154 : vector<1x32xf32>
    %156 = arith.negf %155 : vector<1x32xf32>
    %157 = math.exp %156 : vector<1x32xf32>
    %cst_34 = arith.constant 1.000000e+00 : f32
    %158 = vector.broadcast %cst_34 : f32 to vector<1x32xf32>
    %159 = arith.addf %158, %157 : vector<1x32xf32>
    %160 = arith.divf %158, %159 : vector<1x32xf32>
    %161 = vector.extract_strided_slice %143 {offsets = [0, 64], sizes = [1, 32], strides = [1, 1]} : vector<1x96xf32> to vector<1x32xf32>
    %162 = vector.extract_strided_slice %144 {offsets = [0, 64], sizes = [1, 32], strides = [1, 1]} : vector<1x96xf32> to vector<1x32xf32>
    %163 = arith.addf %162, %25 : vector<1x32xf32>
    %164 = arith.mulf %152, %163 : vector<1x32xf32>
    %165 = arith.addf %161, %164 : vector<1x32xf32>
    %166 = math.tanh %165 : vector<1x32xf32>
    %cst_35 = arith.constant 1.000000e+00 : f32
    %167 = vector.broadcast %cst_35 : f32 to vector<1x32xf32>
    %168 = arith.subf %167, %160 : vector<1x32xf32>
    %169 = arith.mulf %168, %166 : vector<1x32xf32>
    %170 = arith.mulf %160, %142 : vector<1x32xf32>
    %171 = arith.addf %169, %170 : vector<1x32xf32>
    %172 = vector.extract_strided_slice %23 {offsets = [5, 0], sizes = [1, 96], strides = [1, 1]} : vector<6x96xf32> to vector<1x96xf32>
    %cst_36 = arith.constant dense<0.000000e+00> : vector<1x96xf32>
    %173 = tpu.matmul %171, %24, %cst_36 {dimension_numbers = #tpu.dot_dimension_numbers<[1], [0], [0], [1], [0, 0, 1, 1], [], []>} : vector<1x32xf32>, vector<32x96xf32>, vector<1x96xf32> -> vector<1x96xf32>
    %174 = vector.extract_strided_slice %172 {offsets = [0, 0], sizes = [1, 32], strides = [1, 1]} : vector<1x96xf32> to vector<1x32xf32>
    %175 = vector.extract_strided_slice %173 {offsets = [0, 0], sizes = [1, 32], strides = [1, 1]} : vector<1x96xf32> to vector<1x32xf32>
    %176 = arith.addf %174, %175 : vector<1x32xf32>
    %177 = arith.negf %176 : vector<1x32xf32>
    %178 = math.exp %177 : vector<1x32xf32>
    %cst_37 = arith.constant 1.000000e+00 : f32
    %179 = vector.broadcast %cst_37 : f32 to vector<1x32xf32>
    %180 = arith.addf %179, %178 : vector<1x32xf32>
    %181 = arith.divf %179, %180 : vector<1x32xf32>
    %182 = vector.extract_strided_slice %172 {offsets = [0, 32], sizes = [1, 32], strides = [1, 1]} : vector<1x96xf32> to vector<1x32xf32>
    %183 = vector.extract_strided_slice %173 {offsets = [0, 32], sizes = [1, 32], strides = [1, 1]} : vector<1x96xf32> to vector<1x32xf32>
    %184 = arith.addf %182, %183 : vector<1x32xf32>
    %185 = arith.negf %184 : vector<1x32xf32>
    %186 = math.exp %185 : vector<1x32xf32>
    %cst_38 = arith.constant 1.000000e+00 : f32
    %187 = vector.broadcast %cst_38 : f32 to vector<1x32xf32>
    %188 = arith.addf %187, %186 : vector<1x32xf32>
    %189 = arith.divf %187, %188 : vector<1x32xf32>
    %190 = vector.extract_strided_slice %172 {offsets = [0, 64], sizes = [1, 32], strides = [1, 1]} : vector<1x96xf32> to vector<1x32xf32>
    %191 = vector.extract_strided_slice %173 {offsets = [0, 64], sizes = [1, 32], strides = [1, 1]} : vector<1x96xf32> to vector<1x32xf32>
    %192 = arith.addf %191, %25 : vector<1x32xf32>
    %193 = arith.mulf %181, %192 : vector<1x32xf32>
    %194 = arith.addf %190, %193 : vector<1x32xf32>
    %195 = math.tanh %194 : vector<1x32xf32>
    %cst_39 = arith.constant 1.000000e+00 : f32
    %196 = vector.broadcast %cst_39 : f32 to vector<1x32xf32>
    %197 = arith.subf %196, %189 : vector<1x32xf32>
    %198 = arith.mulf %197, %195 : vector<1x32xf32>
    %199 = arith.mulf %189, %171 : vector<1x32xf32>
    %200 = arith.addf %198, %199 : vector<1x32xf32>
    %201 = tpu.concatenate %55, %84, %113, %142, %171, %200 in 0 : vector<1x32xf32>, vector<1x32xf32>, vector<1x32xf32>, vector<1x32xf32>, vector<1x32xf32>, vector<1x32xf32> -> vector<6x32xf32>
    %c0_40 = arith.constant 0 : index
    %c0_41 = arith.constant 0 : index
    %202 = vector.load %arg10[%c0_40, %c0_41] : memref<32x32xf32, #tpu.memory_space<vmem>>, vector<32x32xf32>
    %c0_42 = arith.constant 0 : index
    %c0_43 = arith.constant 0 : index
    %203 = vector.load %arg4[%c0_42, %c0_43] : memref<32x8xf32, #tpu.memory_space<vmem>>, vector<32x8xf32>
    %cst_44 = arith.constant dense<0.000000e+00> : vector<32x8xf32>
    %204 = tpu.matmul %202, %203, %cst_44 {dimension_numbers = #tpu.dot_dimension_numbers<[1], [0], [0], [1], [0, 0, 1, 1], [], []>} : vector<32x32xf32>, vector<32x8xf32>, vector<32x8xf32> -> vector<32x8xf32>
    %cst_45 = arith.constant dense<0.000000e+00> : vector<6x8xf32>
    %205 = tpu.matmul %201, %204, %cst_45 {dimension_numbers = #tpu.dot_dimension_numbers<[1], [0], [0], [1], [0, 0, 1, 1], [], []>} : vector<6x32xf32>, vector<32x8xf32>, vector<6x8xf32> -> vector<6x8xf32>
    %cst_46 = arith.constant dense<0xFF800000> : vector<6xf32>
    %206 = vector.multi_reduction <maximumf>, %205, %cst_46 [1] : vector<6x8xf32> to vector<6xf32>
    %207 = vector.shape_cast %206 : vector<6xf32> to vector<6x1xf32>
    %208 = vector.broadcast %207 : vector<6x1xf32> to vector<6x8xf32>
    %209 = arith.subf %205, %208 : vector<6x8xf32>
    %210 = math.exp %209 : vector<6x8xf32>
    %cst_47 = arith.constant dense<0.000000e+00> : vector<6xf32>
    %211 = vector.multi_reduction <add>, %210, %cst_47 [1] : vector<6x8xf32> to vector<6xf32>
    %212 = vector.shape_cast %211 : vector<6xf32> to vector<6x1xf32>
    %213 = vector.broadcast %212 : vector<6x1xf32> to vector<6x8xf32>
    %214 = arith.divf %210, %213 : vector<6x8xf32>
    %c0_48 = arith.constant 0 : index
    %c0_49 = arith.constant 0 : index
    %215 = vector.load %arg3[%c0_48, %c0_49] : memref<8x32xf32, #tpu.memory_space<vmem>>, vector<8x32xf32>
    %c0_50 = arith.constant 0 : index
    %c0_51 = arith.constant 0 : index
    %216 = vector.load %arg12[%c0_50, %c0_51] : memref<32x64xf32, #tpu.memory_space<vmem>>, vector<32x64xf32>
    %cst_52 = arith.constant dense<0.000000e+00> : vector<8x64xf32>
    %217 = tpu.matmul %215, %216, %cst_52 {dimension_numbers = #tpu.dot_dimension_numbers<[1], [0], [0], [1], [0, 0, 1, 1], [], []>} : vector<8x32xf32>, vector<32x64xf32>, vector<8x64xf32> -> vector<8x64xf32>
    %c0_53 = arith.constant 0 : index
    %c0_54 = arith.constant 0 : index
    %218 = vector.load %arg11[%c0_53, %c0_54] : memref<32x64xf32, #tpu.memory_space<vmem>>, vector<32x64xf32>
    %cst_55 = arith.constant dense<0.000000e+00> : vector<6x64xf32>
    %219 = tpu.matmul %201, %218, %cst_55 {dimension_numbers = #tpu.dot_dimension_numbers<[1], [0], [0], [1], [0, 0, 1, 1], [], []>} : vector<6x32xf32>, vector<32x64xf32>, vector<6x64xf32> -> vector<6x64xf32>
    %cst_56 = arith.constant dense<0.000000e+00> : vector<6x64xf32>
    %220 = tpu.matmul %214, %217, %cst_56 {dimension_numbers = #tpu.dot_dimension_numbers<[1], [0], [0], [1], [0, 0, 1, 1], [], []>} : vector<6x8xf32>, vector<8x64xf32>, vector<6x64xf32> -> vector<6x64xf32>
    %221 = arith.addf %219, %220 : vector<6x64xf32>
    %c0_57 = arith.constant 0 : index
    %c0_58 = arith.constant 0 : index
    %222 = vector.load %arg13[%c0_57, %c0_58] : memref<1x64xf32, #tpu.memory_space<vmem>>, vector<1x64xf32>
    %223 = vector.broadcast %222 : vector<1x64xf32> to vector<6x64xf32>
    %224 = arith.addf %221, %223 : vector<6x64xf32>
    %cst_59 = arith.constant dense<0xFF800000> : vector<6xf32>
    %225 = vector.multi_reduction <maximumf>, %224, %cst_59 [1] : vector<6x64xf32> to vector<6xf32>
    %226 = vector.shape_cast %225 : vector<6xf32> to vector<6x1xf32>
    %227 = vector.broadcast %226 : vector<6x1xf32> to vector<6x64xf32>
    %228 = arith.subf %224, %227 : vector<6x64xf32>
    %229 = math.exp %228 : vector<6x64xf32>
    %cst_60 = arith.constant dense<0.000000e+00> : vector<6xf32>
    %230 = vector.multi_reduction <add>, %229, %cst_60 [1] : vector<6x64xf32> to vector<6xf32>
    %231 = vector.shape_cast %230 : vector<6xf32> to vector<6x1xf32>
    %232 = math.log %231 : vector<6x1xf32>
    %233 = arith.addf %226, %232 : vector<6x1xf32>
    %234 = vector.broadcast %233 : vector<6x1xf32> to vector<6x64xf32>
    %235 = arith.subf %224, %234 : vector<6x64xf32>
    %cst_61 = arith.constant 0.000000e+00 : f32
    %236 = vector.broadcast %cst_61 : f32 to vector<6x24xf32>
    %237 = tpu.concatenate %235, %201, %214, %236 in 1 : vector<6x64xf32>, vector<6x32xf32>, vector<6x8xf32>, vector<6x24xf32> -> vector<6x128xf32>
    %c0_62 = arith.constant 0 : index
    %c0_63 = arith.constant 0 : index
    %238 = vector.load %arg14[%c0_62, %c0_63] : memref<6x128xf32, #tpu.memory_space<vmem>>, vector<6x128xf32>
    tpu.vector_store %arg14[%c0_62, %c0_63], %237 {strides = array<i32>} : memref<6x128xf32, #tpu.memory_space<vmem>>, vector<6x128xf32>,
    return
  }
  func.func @transform_0(%arg0: i32, %arg1: memref<6xi32, #tpu.memory_space<smem>>) -> (i32, i32) {
    %c0_i32 = arith.constant 0 : i32
    %c0_i32_0 = arith.constant 0 : i32
    %c0_i32_1 = arith.constant 0 : i32
    return %c0_i32, %c0_i32_0 : i32, i32
  }
  func.func @transform_1(%arg0: i32, %arg1: memref<6xi32, #tpu.memory_space<smem>>) -> (i32, i32) {
    %c0_i32 = arith.constant 0 : i32
    %c0_i32_0 = arith.constant 0 : i32
    %c0_i32_1 = arith.constant 0 : i32
    return %c0_i32, %c0_i32_0 : i32, i32
  }
  func.func @transform_2(%arg0: i32, %arg1: memref<6xi32, #tpu.memory_space<smem>>) -> (i32, i32) {
    %c0_i32 = arith.constant 0 : i32
    %c0_i32_0 = arith.constant 0 : i32
    %c0_i32_1 = arith.constant 0 : i32
    return %c0_i32, %c0_i32_0 : i32, i32
  }
  func.func @transform_3(%arg0: i32, %arg1: memref<6xi32, #tpu.memory_space<smem>>) -> (i32, i32) {
    %c0_i32 = arith.constant 0 : i32
    %c0_i32_0 = arith.constant 0 : i32
    %c0_i32_1 = arith.constant 0 : i32
    return %c0_i32, %c0_i32_0 : i32, i32
  }
  func.func @transform_4(%arg0: i32, %arg1: memref<6xi32, #tpu.memory_space<smem>>) -> (i32, i32) {
    %c0_i32 = arith.constant 0 : i32
    %c0_i32_0 = arith.constant 0 : i32
    %c0_i32_1 = arith.constant 0 : i32
    return %c0_i32, %c0_i32_0 : i32, i32
  }
  func.func @transform_5(%arg0: i32, %arg1: memref<6xi32, #tpu.memory_space<smem>>) -> (i32, i32) {
    %c0_i32 = arith.constant 0 : i32
    %c0_i32_0 = arith.constant 0 : i32
    %c0_i32_1 = arith.constant 0 : i32
    return %c0_i32, %c0_i32_0 : i32, i32
  }
  func.func @transform_6(%arg0: i32, %arg1: memref<6xi32, #tpu.memory_space<smem>>) -> (i32, i32) {
    %c0_i32 = arith.constant 0 : i32
    %c0_i32_0 = arith.constant 0 : i32
    %c0_i32_1 = arith.constant 0 : i32
    return %c0_i32, %c0_i32_0 : i32, i32
  }
  func.func @transform_7(%arg0: i32, %arg1: memref<6xi32, #tpu.memory_space<smem>>) -> (i32, i32) {
    %c0_i32 = arith.constant 0 : i32
    %c0_i32_0 = arith.constant 0 : i32
    %c0_i32_1 = arith.constant 0 : i32
    return %c0_i32, %c0_i32_0 : i32, i32
  }
  func.func @transform_8(%arg0: i32, %arg1: memref<6xi32, #tpu.memory_space<smem>>) -> (i32, i32) {
    %c0_i32 = arith.constant 0 : i32
    %c0_i32_0 = arith.constant 0 : i32
    %c0_i32_1 = arith.constant 0 : i32
    return %c0_i32, %c0_i32_0 : i32, i32
  }
  func.func @transform_9(%arg0: i32, %arg1: memref<6xi32, #tpu.memory_space<smem>>) -> (i32, i32) {
    %c0_i32 = arith.constant 0 : i32
    %c0_i32_0 = arith.constant 0 : i32
    %c0_i32_1 = arith.constant 0 : i32
    return %c0_i32, %c0_i32_0 : i32, i32
  }
  func.func @transform_10(%arg0: i32, %arg1: memref<6xi32, #tpu.memory_space<smem>>) -> (i32, i32) {
    %c0_i32 = arith.constant 0 : i32
    %c0_i32_0 = arith.constant 0 : i32
    %c0_i32_1 = arith.constant 0 : i32
    return %c0_i32, %c0_i32_0 : i32, i32
  }
  func.func @transform_11(%arg0: i32, %arg1: memref<6xi32, #tpu.memory_space<smem>>) -> (i32, i32) {
    %c0_i32 = arith.constant 0 : i32
    %c0_i32_0 = arith.constant 0 : i32
    %c0_i32_1 = arith.constant 0 : i32
    return %c0_i32, %c0_i32_0 : i32, i32
  }
  func.func @transform_12(%arg0: i32, %arg1: memref<6xi32, #tpu.memory_space<smem>>) -> (i32, i32) {
    %c0_i32 = arith.constant 0 : i32
    %c0_i32_0 = arith.constant 0 : i32
    %c0_i32_1 = arith.constant 0 : i32
    return %c0_i32, %c0_i32_0 : i32, i32
  }
}

</mosaic_0001>

<llo_original>
// kernel: luong_decode.1
$region0: #{luong_decode.1}
  #allocation0 [shape = 'u32[]', space=smem, size = 0x4, offset = 0x4, fixed_abs, tag = 'smem constant byte address 0x4 - core index']
  #allocation1 [shape = 'u32[144,128]{1,0:T(1,128)}', space=vmem, size = 0x12000, scoped, tag = 'internal scratch']
  #allocation2 [shape = 's32[1]{0}', space=sflag, size = 0x4, scoped, tag = 'scoped memory for luong_decode.1']
  #allocation3 [shape = 'u8[512]{0}', space=smem, size = 0x200, scoped, tag = 'prefetched SMEM operand 0']
  %s0 = inlined_call_operand.vmem [shape: s32[6], index: 0, kind: input, shape index: {}]
  %s1 = inlined_call_operand.vmem [shape: f32[64,32], index: 1, kind: input, shape index: {}]
  %s2 = inlined_call_operand.vmem [shape: f32[8,32], index: 2, kind: input, shape index: {}]
  %s3 = inlined_call_operand.vmem [shape: f32[32,8], index: 3, kind: input, shape index: {}]
  %s4 = inlined_call_operand.vmem [shape: f32[1,32], index: 4, kind: input, shape index: {}]
  %s5 = inlined_call_operand.vmem [shape: f32[32,96], index: 5, kind: input, shape index: {}]
  %s6 = inlined_call_operand.vmem [shape: f32[32,96], index: 6, kind: input, shape index: {}]
  %s7 = inlined_call_operand.vmem [shape: f32[1,96], index: 7, kind: input, shape index: {}]
  %s8 = inlined_call_operand.vmem [shape: f32[1,32], index: 8, kind: input, shape index: {}]
  %s9 = inlined_call_operand.vmem [shape: f32[32,32], index: 9, kind: input, shape index: {}]
  %s10 = inlined_call_operand.vmem [shape: f32[32,64], index: 10, kind: input, shape index: {}]
  %s11 = inlined_call_operand.hbm [shape: f32[32,64], index: 11, kind: input, shape index: {}]
  %s12 = inlined_call_operand.vmem [shape: f32[1,64], index: 12, kind: input, shape index: {}]
  %s13 = inlined_call_operand.vmem [shape: f32[6,128], index: 13, kind: output, shape index: {}]
  %s14 = sld [smem:[#allocation0]]
  $region62: #{luong_decode.1} parent=0
    _
  %s16 = ssub.s32 1, %s14
  %s17 = scalar_select 0, %s16, %s14
  %s18 = sshll.u32 %s0, 4
  %s19 = int_to_ptr.vmem [resolvable:$true] %s18
  %21 = dma.vmem_to_smem %s19, 16, [#allocation3], [#allocation2]
  %22 = dma.done [#allocation2], 16
  %23 = sfence
  $region1: #{luong_decode.1} parent=0
    #allocation4 [shape = 'u8[16384]{0}', space=vmem, size = 0x4000, scoped, tag = 'input window, operand 11, single buffered']
    #allocation5 [shape = 's32[1]{0}', space=sflag, size = 0x4, scoped, tag = 'scoped memory for luong_decode.1']
    %24 = vsyncpa [#allocation5], 0
    // Predicated region
    $region2: #{luong_decode.1} parent=1 // pred_check
      _
    $region3: #{luong_decode.1} parent=1 // pred_check_branch
      %26 = sbr.rel (0) target = $region5
    $region4: #{luong_decode.1} parent=1 // pred_region
      _
    $region5: #{luong_decode.1} parent=1 // pred_fallthru
      _
    // Predicated region
    $region6: #{luong_decode.1} parent=1 // pred_check
      _
    $region7: #{luong_decode.1} parent=1 // pred_check_branch
      %28 = sbr.rel (0) target = $region9
    $region8: #{luong_decode.1} parent=1 // pred_region
      _
    $region9: #{luong_decode.1} parent=1 // pred_fallthru
      _
    // Predicated region
    $region10: #{luong_decode.1} parent=1 // pred_check
      _
    $region11: #{luong_decode.1} parent=1 // pred_check_branch
      %30 = sbr.rel (0) target = $region13
    $region12: #{luong_decode.1} parent=1 // pred_region
      _
    $region13: #{luong_decode.1} parent=1 // pred_fallthru
      _
    // Predicated region
    $region14: #{luong_decode.1} parent=1 // pred_check
      _
    $region15: #{luong_decode.1} parent=1 // pred_check_branch
      %32 = sbr.rel (0) target = $region17
    $region16: #{luong_decode.1} parent=1 // pred_region
      _
    $region17: #{luong_decode.1} parent=1 // pred_fallthru
      _
    // Predicated region
    $region18: #{luong_decode.1} parent=1 // pred_check
      _
    $region19: #{luong_decode.1} parent=1 // pred_check_branch
      %34 = sbr.rel (0) target = $region21
    $region20: #{luong_decode.1} parent=1 // pred_region
      _
    $region21: #{luong_decode.1} parent=1 // pred_fallthru
      _
    // Predicated region
    $region22: #{luong_decode.1} parent=1 // pred_check
      _
    $region23: #{luong_decode.1} parent=1 // pred_check_branch
      %36 = sbr.rel (0) target = $region25
    $region24: #{luong_decode.1} parent=1 // pred_region
      _
    $region25: #{luong_decode.1} parent=1 // pred_fallthru
      _
    // Predicated region
    $region26: #{luong_decode.1} parent=1 // pred_check
      _
    $region27: #{luong_decode.1} parent=1 // pred_check_branch
      %38 = sbr.rel (0) target = $region29
    $region28: #{luong_decode.1} parent=1 // pred_region
      _
    $region29: #{luong_decode.1} parent=1 // pred_fallthru
      _
    // Predicated region
    $region30: #{luong_decode.1} parent=1 // pred_check
      _
    $region31: #{luong_decode.1} parent=1 // pred_check_branch
      %40 = sbr.rel (0) target = $region33
    $region32: #{luong_decode.1} parent=1 // pred_region
      _
    $region33: #{luong_decode.1} parent=1 // pred_fallthru
      _
    // Predicated region
    $region34: #{luong_decode.1} parent=1 // pred_check
      _
    $region35: #{luong_decode.1} parent=1 // pred_check_branch
      %42 = sbr.rel (0) target = $region37
    $region36: #{luong_decode.1} parent=1 // pred_region
      _
    $region37: #{luong_decode.1} parent=1 // pred_fallthru
      _
    // Predicated region
    $region38: #{luong_decode.1} parent=1 // pred_check
      _
    $region39: #{luong_decode.1} parent=1 // pred_check_branch
      %44 = sbr.rel (0) target = $region41
    $region40: #{luong_decode.1} parent=1 // pred_region
      _
    $region41: #{luong_decode.1} parent=1 // pred_fallthru
      _
    // Predicated region
    $region42: #{luong_decode.1} parent=1 // pred_check
      _
    $region43: #{luong_decode.1} parent=1 // pred_check_branch
      %46 = sbr.rel (0) target = $region45
    $region44: #{luong_decode.1} parent=1 // pred_region
      %s48 = ssub.s32 512, 512
      %49 = vsyncadd [#allocation5], %s48
      %s50 = sshll.u32 [#allocation4], 4
      %s51 = int_to_ptr.vmem [resolvable:$true] %s50
      %56 = dma.hbm_to_vmem [thread:$0]  %s11, 512, %s51, [#allocation5], 128, 128, 8
    $region45: #{luong_decode.1} parent=1 // pred_fallthru
      _
    // Predicated region
    $region46: #{luong_decode.1} parent=1 // pred_check
      _
    $region47: #{luong_decode.1} parent=1 // pred_check_branch
      %58 = sbr.rel (0) target = $region49
    $region48: #{luong_decode.1} parent=1 // pred_region
      _
    $region49: #{luong_decode.1} parent=1 // pred_fallthru
      _
    // Predicated region
    $region50: #{luong_decode.1} parent=1 // pred_check
      _
    $region51: #{luong_decode.1} parent=1 // pred_check_branch
      %60 = sbr.rel (0) target = $region53
    $region52: #{luong_decode.1} parent=1 // pred_region
      %61 = dma.done [#allocation5], 512
    $region53: #{luong_decode.1} parent=1 // pred_fallthru
      _
    %s62 = sld [smem:[#allocation3]]
    %s63 = scalar_lea.vmem %s1, %s62
    %v64 = vld [vmem:[%s63] sm:$0x1]
    %s65 = sld [smem:[#allocation3 + $0x1]]
    %s66 = scalar_lea.vmem %s1, %s65
    %v67 = vld [vmem:[%s66] sm:$0x1]
    %s68 = sld [smem:[#allocation3 + $0x2]]
    %s69 = scalar_lea.vmem %s1, %s68
    %v70 = vld [vmem:[%s69] sm:$0x1]
    %s71 = sld [smem:[#allocation3 + $0x3]]
    %s72 = scalar_lea.vmem %s1, %s71
    %v73 = vld [vmem:[%s72] sm:$0x1]
    %s74 = sld [smem:[#allocation3 + $0x4]]
    %s75 = scalar_lea.vmem %s1, %s74
    %v76 = vld [vmem:[%s75] sm:$0x1]
    %s77 = sld [smem:[#allocation3 + $0x5]]
    %s78 = scalar_lea.vmem %s1, %s77
    %v79 = vld [vmem:[%s78] sm:$0x1]
    %v81 = vrot.slane %v67, 7
    %v84 = vrot.slane %v70, 6
    %v87 = vrot.slane %v73, 5
    %v90 = vrot.slane %v76, 4
    %v93 = vrot.slane %v79, 3
    %vm95 = vcmask 1040384
    %v96 = vsel %vm95, %v64, %v81
    %vm97 = vcmask 1041408
    %v98 = vsel %vm97, %v96, %v84
    %vm99 = vcmask 1042432
    %v100 = vsel %vm99, %v98, %v87
    %vm101 = vcmask 1043456
    %v102 = vsel %vm101, %v100, %v90
    %vm103 = vcmask 1044480
    %v104 = vsel %vm103, %v102, %v93
    %v105 = vld [vmem:[%s5] sm:$0xff]
    %v106 = vld [vmem:[%s5 + $0x8] sm:$0xff]
    %v107 = vld [vmem:[%s5 + $0x10] sm:$0xff]
    %v108 = vld [vmem:[%s5 + $0x18] sm:$0xff]
    %v109 = vld [vmem:[%s7] sm:$0x1]
    %v111 = vlaneseq
    %v112 = vshrl.u32 %v111, 7
    %v113 = vsub.s32 0, %v112
    %v114 = vrot.slane %v109, %v113
    %vm116 = vcmask 261120
    %v118 = vsel %vm116, %v104, 0
    %120 = vmatprep.subr.mxu0 0.0
    %121 = vmatpush1.msra.mxu0 0.0
    %122 = vmatprep.subr.mxu0 0.0
    %123 = vmatpush1.msra.mxu0 0.0
    %124 = vmatprep.subr.mxu0 0.0
    %125 = vmatpush1.msra.mxu0 0.0
    %126 = vmatprep.subr.mxu0 0.0
    %127 = vmatpush1.msra.mxu0 0.0
    %128 = vmatprep.subr.mxu0 0.0
    %129 = vmatpush1.msra.mxu0 0.0
    %130 = vmatprep.subr.mxu0 0.0
    %131 = vmatpush1.msra.mxu0 0.0
    %132 = vmatprep.subr.mxu0 0.0
    %133 = vmatpush1.msra.mxu0 0.0
    %134 = vmatprep.subr.mxu0 0.0
    %135 = vmatpush1.msra.mxu0 0.0
    %136 = vmatprep.subr.mxu0 0.0
    %137 = vmatpush1.msra.mxu0 0.0
    %138 = vmatprep.subr.mxu0 0.0
    %139 = vmatpush1.msra.mxu0 0.0
    %140 = vmatprep.subr.mxu0 0.0
    %141 = vmatpush1.msra.mxu0 0.0
    %142 = vmatprep.subr.mxu0 0.0
    %143 = vmatpush1.msra.mxu0 0.0
    %144 = vmatprep.subr.mxu0 0.0
    %145 = vmatpush1.msra.mxu0 %v108
    %146 = vmatprep.subr.mxu0 0.0
    %147 = vmatpush1.msra.mxu0 %v107
    %148 = vmatprep.subr.mxu0 0.0
    %149 = vmatpush1.msra.mxu0 %v106
    %150 = vmatprep.subr.mxu0 0.0
    %151 = vmatpush1.msra.mxu0 %v105
    %152 = vmatprep.subr.mxu0 0.0
    %153 = vmatpush2.msra.mxu0 0.0
    %154 = vmatprep.subr.mxu0 0.0
    %155 = vmatpush2.msra.mxu0 0.0
    %156 = vmatprep.subr.mxu0 0.0
    %157 = vmatpush2.msra.mxu0 0.0
    %158 = vmatprep.subr.mxu0 0.0
    %159 = vmatpush2.msra.mxu0 0.0
    %160 = vmatprep.subr.mxu0 0.0
    %161 = vmatpush2.msra.mxu0 0.0
    %162 = vmatprep.subr.mxu0 0.0
    %163 = vmatpush2.msra.mxu0 0.0
    %164 = vmatprep.subr.mxu0 0.0
    %165 = vmatpush2.msra.mxu0 0.0
    %166 = vmatprep.subr.mxu0 0.0
    %167 = vmatpush2.msra.mxu0 0.0
    %168 = vmatprep.subr.mxu0 0.0
    %169 = vmatpush2.msra.mxu0 0.0
    %170 = vmatprep.subr.mxu0 0.0
    %171 = vmatpush2.msra.mxu0 0.0
    %172 = vmatprep.subr.mxu0 0.0
    %173 = vmatpush2.msra.mxu0 0.0
    %174 = vmatprep.subr.mxu0 0.0
    %175 = vmatpush2.msra.mxu0 0.0
    %176 = vmatprep.subr.mxu0 0.0
    %177 = vmatpush2.msra.mxu0 0.0
    %178 = vmatprep.subr.mxu0 0.0
    %179 = vmatpush2.msra.mxu0 0.0
    %180 = vmatprep.subr.mxu0 0.0
    %181 = vmatpush2.msra.mxu0 0.0
    %182 = vmatprep.subr.mxu0 0.0
    %183 = vmatpush2.msra.mxu0 0.0
    %184 = vmatprep.mubr.f32.mxu0 0.0
    %185 = vmatmul.mubr.f32.gmra.mxu0 %v118
    %v186 = vpop.f32.mrf.mxu0
    %v187 = vadd.f32 %v114, %v186
    %v188 = vpop.f32.mrf.mxu0
    %189 = vdwg.mxu0
    %v190 = vld [vmem:[%s6] sm:$0xff]
    %v191 = vld [vmem:[%s6 + $0x8] sm:$0xff]
    %v192 = vld [vmem:[%s6 + $0x10] sm:$0xff]
    %v193 = vld [vmem:[%s6 + $0x18] sm:$0xff]
    %v194 = vld [vmem:[%s8] sm:$0x1]
    %v195 = vld [vmem:[%s4] sm:$0x1]
    %v197 = vsel %vm116, %v195, 0
    %199 = vmatprep.subr.mxu0 0.0
    %200 = vmatpush1.msra.mxu0 0.0
    %201 = vmatprep.subr.mxu0 0.0
    %202 = vmatpush1.msra.mxu0 0.0
    %203 = vmatprep.subr.mxu0 0.0
    %204 = vmatpush1.msra.mxu0 0.0
    %205 = vmatprep.subr.mxu0 0.0
    %206 = vmatpush1.msra.mxu0 0.0
    %207 = vmatprep.subr.mxu0 0.0
    %208 = vmatpush1.msra.mxu0 0.0
    %209 = vmatprep.subr.mxu0 0.0
    %210 = vmatpush1.msra.mxu0 0.0
    %211 = vmatprep.subr.mxu0 0.0
    %212 = vmatpush1.msra.mxu0 0.0
    %213 = vmatprep.subr.mxu0 0.0
    %214 = vmatpush1.msra.mxu0 0.0
    %215 = vmatprep.subr.mxu0 0.0
    %216 = vmatpush1.msra.mxu0 0.0
    %217 = vmatprep.subr.mxu0 0.0
    %218 = vmatpush1.msra.mxu0 0.0
    %219 = vmatprep.subr.mxu0 0.0
    %220 = vmatpush1.msra.mxu0 0.0
    %221 = vmatprep.subr.mxu0 0.0
    %222 = vmatpush1.msra.mxu0 0.0
    %223 = vmatprep.subr.mxu0 0.0
    %224 = vmatpush1.msra.mxu0 %v193
    %225 = vmatprep.subr.mxu0 0.0
    %226 = vmatpush1.msra.mxu0 %v192
    %227 = vmatprep.subr.mxu0 0.0
    %228 = vmatpush1.msra.mxu0 %v191
    %229 = vmatprep.subr.mxu0 0.0
    %230 = vmatpush1.msra.mxu0 %v190
    %231 = vmatprep.subr.mxu0 0.0
    %232 = vmatpush2.msra.mxu0 0.0
    %233 = vmatprep.subr.mxu0 0.0
    %234 = vmatpush2.msra.mxu0 0.0
    %235 = vmatprep.subr.mxu0 0.0
    %236 = vmatpush2.msra.mxu0 0.0
    %237 = vmatprep.subr.mxu0 0.0
    %238 = vmatpush2.msra.mxu0 0.0
    %239 = vmatprep.subr.mxu0 0.0
    %240 = vmatpush2.msra.mxu0 0.0
    %241 = vmatprep.subr.mxu0 0.0
    %242 = vmatpush2.msra.mxu0 0.0
    %243 = vmatprep.subr.mxu0 0.0
    %244 = vmatpush2.msra.mxu0 0.0
    %245 = vmatprep.subr.mxu0 0.0
    %246 = vmatpush2.msra.mxu0 0.0
    %247 = vmatprep.subr.mxu0 0.0
    %248 = vmatpush2.msra.mxu0 0.0
    %249 = vmatprep.subr.mxu0 0.0
    %250 = vmatpush2.msra.mxu0 0.0
    %251 = vmatprep.subr.mxu0 0.0
    %252 = vmatpush2.msra.mxu0 0.0
    %253 = vmatprep.subr.mxu0 0.0
    %254 = vmatpush2.msra.mxu0 0.0
    %255 = vmatprep.subr.mxu0 0.0
    %256 = vmatpush2.msra.mxu0 0.0
    %257 = vmatprep.subr.mxu0 0.0
    %258 = vmatpush2.msra.mxu0 0.0
    %259 = vmatprep.subr.mxu0 0.0
    %260 = vmatpush2.msra.mxu0 0.0
    %261 = vmatprep.subr.mxu0 0.0
    %262 = vmatpush2.msra.mxu0 0.0
    %263 = vmatprep.mubr.f32.mxu0 0.0
    %264 = vmatmul.mubr.f32.gmra.mxu0 %v197
    %v265 = vpop.f32.mrf.mxu0
    %v266 = vadd.f32 0.0, %v265
    %v267 = vpop.f32.mrf.mxu0
    %268 = vdwg.mxu0
    %v269 = vadd.f32 %v187, %v266
    %v270 = vxor.u32 %v269, 2147483648
    %v271 = vmul.f32 %v270, 1.442695
    %v272 = vpow.pop %v271
    %v273 = vadd.f32 %v272, 1.0
    %v274 = vrcp.pop %v273
    %v275 = vmul.f32 1.0, %v274
    %v277 = vlaneseq
    %v278 = vshrl.u32 %v277, 7
    %v279 = vsub.s32 0, %v278
    %v280 = vrot.slane %v194, %v279
    %281 = vrot.lane.b32.xlu0 %v280, 64
    %v282 = vpop.permute.xlu0 %281
    %v284 = vadd.f32 %v266, %v282
    %286 = vrot.lane.b32.xlu0 %v284, 64
    %v287 = vpop.permute.xlu0 %286
    %v289 = vmul.f32 %v275, %v287
    %291 = vrot.lane.b32.xlu0 %v289, 64
    %v292 = vpop.permute.xlu0 %291
    %v294 = vadd.f32 %v187, %v292
    %v295 = vtanh.pop %v294
    %v296 = vsub.f32 1.0, %v275
    %298 = vrot.lane.b32.xlu0 %v295, 96
    %v299 = vpop.permute.xlu0 %298
    %v301 = vmul.f32 %v296, %v299
    %v302 = vlaneseq
    %v303 = vshrl.u32 %v302, 7
    %v304 = vsub.s32 0, %v303
    %v305 = vrot.slane %v195, %v304
    %306 = vrot.lane.b32.xlu0 %v305, 32
    %v307 = vpop.permute.xlu0 %306
    %v309 = vmul.f32 %v275, %v307
    %v310 = vadd.f32 %v301, %v309
    %312 = vrot.lane.b32.xlu0 %v310, 96
    %v313 = vpop.permute.xlu0 %312
    %v314 = vsel %vm116, %v313, 0
    %316 = vmatprep.subr.mxu0 0.0
    %317 = vmatpush1.msra.mxu0 0.0
    %318 = vmatprep.subr.mxu0 0.0
    %319 = vmatpush1.msra.mxu0 0.0
    %320 = vmatprep.subr.mxu0 0.0
    %321 = vmatpush1.msra.mxu0 0.0
    %322 = vmatprep.subr.mxu0 0.0
    %323 = vmatpush1.msra.mxu0 0.0
    %324 = vmatprep.subr.mxu0 0.0
    %325 = vmatpush1.msra.mxu0 0.0
    %326 = vmatprep.subr.mxu0 0.0
    %327 = vmatpush1.msra.mxu0 0.0
    %328 = vmatprep.subr.mxu0 0.0
    %329 = vmatpush1.msra.mxu0 0.0
    %330 = vmatprep.subr.mxu0 0.0
    %331 = vmatpush1.msra.mxu0 0.0
    %332 = vmatprep.subr.mxu0 0.0
    %333 = vmatpush1.msra.mxu0 0.0
    %334 = vmatprep.subr.mxu0 0.0
    %335 = vmatpush1.msra.mxu0 0.0
    %336 = vmatprep.subr.mxu0 0.0
    %337 = vmatpush1.msra.mxu0 0.0
    %338 = vmatprep.subr.mxu0 0.0
    %339 = vmatpush1.msra.mxu0 0.0
    %340 = vmatprep.subr.mxu0 0.0
    %341 = vmatpush1.msra.mxu0 %v193
    %342 = vmatprep.subr.mxu0 0.0
    %343 = vmatpush1.msra.mxu0 %v192
    %344 = vmatprep.subr.mxu0 0.0
    %345 = vmatpush1.msra.mxu0 %v191
    %346 = vmatprep.subr.mxu0 0.0
    %347 = vmatpush1.msra.mxu0 %v190
    %348 = vmatprep.subr.mxu0 0.0
    %349 = vmatpush2.msra.mxu0 0.0
    %350 = vmatprep.subr.mxu0 0.0
    %351 = vmatpush2.msra.mxu0 0.0
    %352 = vmatprep.subr.mxu0 0.0
    %353 = vmatpush2.msra.mxu0 0.0
    %354 = vmatprep.subr.mxu0 0.0
    %355 = vmatpush2.msra.mxu0 0.0
    %356 = vmatprep.subr.mxu0 0.0
    %357 = vmatpush2.msra.mxu0 0.0
    %358 = vmatprep.subr.mxu0 0.0
    %359 = vmatpush2.msra.mxu0 0.0
    %360 = vmatprep.subr.mxu0 0.0
    %361 = vmatpush2.msra.mxu0 0.0
    %362 = vmatprep.subr.mxu0 0.0
    %363 = vmatpush2.msra.mxu0 0.0
    %364 = vmatprep.subr.mxu0 0.0
    %365 = vmatpush2.msra.mxu0 0.0
    %366 = vmatprep.subr.mxu0 0.0
    %367 = vmatpush2.msra.mxu0 0.0
    %368 = vmatprep.subr.mxu0 0.0
    %369 = vmatpush2.msra.mxu0 0.0
    %370 = vmatprep.subr.mxu0 0.0
    %371 = vmatpush2.msra.mxu0 0.0
    %372 = vmatprep.subr.mxu0 0.0
    %373 = vmatpush2.msra.mxu0 0.0
    %374 = vmatprep.subr.mxu0 0.0
    %375 = vmatpush2.msra.mxu0 0.0
    %376 = vmatprep.subr.mxu0 0.0
    %377 = vmatpush2.msra.mxu0 0.0
    %378 = vmatprep.subr.mxu0 0.0
    %379 = vmatpush2.msra.mxu0 0.0
    %380 = vmatprep.mubr.f32.mxu0 0.0
    %381 = vmatmul.mubr.f32.gmra.mxu0 %v314
    %v382 = vpop.f32.mrf.mxu0
    %v383 = vadd.f32 0.0, %v382
    %v384 = vpop.f32.mrf.mxu0
    %385 = vdwg.mxu0
    %v387 = vrot.slane %v383, 7
    %v389 = vadd.f32 %v187, %v387
    %v390 = vxor.u32 %v389, 2147483648
    %v391 = vmul.f32 %v390, 1.442695
    %v392 = vpow.pop %v391
    %v393 = vadd.f32 %v392, 1.0
    %v394 = vrcp.pop %v393
    %v395 = vmul.f32 1.0, %v394
    %v396 = vadd.f32 %v383, %v282
    %v398 = vrot.slane %v396, 7
    %399 = vrot.lane.b32.xlu0 %v398, 64
    %v400 = vpop.permute.xlu0 %399
    %v402 = vmul.f32 %v395, %v400
    %404 = vrot.lane.b32.xlu0 %v402, 64
    %v405 = vpop.permute.xlu0 %404
    %v407 = vadd.f32 %v187, %v405
    %v408 = vtanh.pop %v407
    %v409 = vsub.f32 1.0, %v395
    %411 = vrot.lane.b32.xlu0 %v408, 96
    %v412 = vpop.permute.xlu0 %411
    %v414 = vmul.f32 %v409, %v412
    %v415 = vrot.slane %v310, 7
    %v417 = vmul.f32 %v395, %v415
    %v418 = vadd.f32 %v414, %v417
    %v420 = vrot.slane %v418, 1
    %421 = vrot.lane.b32.xlu0 %v420, 96
    %v422 = vpop.permute.xlu0 %421
    %v423 = vsel %vm116, %v422, 0
    %425 = vmatprep.subr.mxu0 0.0
    %426 = vmatpush1.msra.mxu0 0.0
    %427 = vmatprep.subr.mxu0 0.0
    %428 = vmatpush1.msra.mxu0 0.0
    %429 = vmatprep.subr.mxu0 0.0
    %430 = vmatpush1.msra.mxu0 0.0
    %431 = vmatprep.subr.mxu0 0.0
    %432 = vmatpush1.msra.mxu0 0.0
    %433 = vmatprep.subr.mxu0 0.0
    %434 = vmatpush1.msra.mxu0 0.0
    %435 = vmatprep.subr.mxu0 0.0
    %436 = vmatpush1.msra.mxu0 0.0
    %437 = vmatprep.subr.mxu0 0.0
    %438 = vmatpush1.msra.mxu0 0.0
    %439 = vmatprep.subr.mxu0 0.0
    %440 = vmatpush1.msra.mxu0 0.0
    %441 = vmatprep.subr.mxu0 0.0
    %442 = vmatpush1.msra.mxu0 0.0
    %443 = vmatprep.subr.mxu0 0.0
    %444 = vmatpush1.msra.mxu0 0.0
    %445 = vmatprep.subr.mxu0 0.0
    %446 = vmatpush1.msra.mxu0 0.0
    %447 = vmatprep.subr.mxu0 0.0
    %448 = vmatpush1.msra.mxu0 0.0
    %449 = vmatprep.subr.mxu0 0.0
    %450 = vmatpush1.msra.mxu0 %v193
    %451 = vmatprep.subr.mxu0 0.0
    %452 = vmatpush1.msra.mxu0 %v192
    %453 = vmatprep.subr.mxu0 0.0
    %454 = vmatpush1.msra.mxu0 %v191
    %455 = vmatprep.subr.mxu0 0.0
    %456 = vmatpush1.msra.mxu0 %v190
    %457 = vmatprep.subr.mxu0 0.0
    %458 = vmatpush2.msra.mxu0 0.0
    %459 = vmatprep.subr.mxu0 0.0
    %460 = vmatpush2.msra.mxu0 0.0
    %461 = vmatprep.subr.mxu0 0.0
    %462 = vmatpush2.msra.mxu0 0.0
    %463 = vmatprep.subr.mxu0 0.0
    %464 = vmatpush2.msra.mxu0 0.0
    %465 = vmatprep.subr.mxu0 0.0
    %466 = vmatpush2.msra.mxu0 0.0
    %467 = vmatprep.subr.mxu0 0.0
    %468 = vmatpush2.msra.mxu0 0.0
    %469 = vmatprep.subr.mxu0 0.0
    %470 = vmatpush2.msra.mxu0 0.0
    %471 = vmatprep.subr.mxu0 0.0
    %472 = vmatpush2.msra.mxu0 0.0
    %473 = vmatprep.subr.mxu0 0.0
    %474 = vmatpush2.msra.mxu0 0.0
    %475 = vmatprep.subr.mxu0 0.0
    %476 = vmatpush2.msra.mxu0 0.0
    %477 = vmatprep.subr.mxu0 0.0
    %478 = vmatpush2.msra.mxu0 0.0
    %479 = vmatprep.subr.mxu0 0.0
    %480 = vmatpush2.msra.mxu0 0.0
    %481 = vmatprep.subr.mxu0 0.0
    %482 = vmatpush2.msra.mxu0 0.0
    %483 = vmatprep.subr.mxu0 0.0
    %484 = vmatpush2.msra.mxu0 0.0
    %485 = vmatprep.subr.mxu0 0.0
    %486 = vmatpush2.msra.mxu0 0.0
    %487 = vmatprep.subr.mxu0 0.0
    %488 = vmatpush2.msra.mxu0 0.0
    %489 = vmatprep.mubr.f32.mxu0 0.0
    %490 = vmatmul.mubr.f32.gmra.mxu0 %v423
    %v491 = vpop.f32.mrf.mxu0
    %v492 = vadd.f32 0.0, %v491
    %v493 = vpop.f32.mrf.mxu0
    %494 = vdwg.mxu0
    %v496 = vrot.slane %v492, 6
    %v498 = vadd.f32 %v187, %v496
    %v499 = vxor.u32 %v498, 2147483648
    %v500 = vmul.f32 %v499, 1.442695
    %v501 = vpow.pop %v500
    %v502 = vadd.f32 %v501, 1.0
    %v503 = vrcp.pop %v502
    %v504 = vmul.f32 1.0, %v503
    %v505 = vadd.f32 %v492, %v282
    %v507 = vrot.slane %v505, 6
    %508 = vrot.lane.b32.xlu0 %v507, 64
    %v509 = vpop.permute.xlu0 %508
    %v511 = vmul.f32 %v504, %v509
    %513 = vrot.lane.b32.xlu0 %v511, 64
    %v514 = vpop.permute.xlu0 %513
    %v516 = vadd.f32 %v187, %v514
    %v517 = vtanh.pop %v516
    %v518 = vsub.f32 1.0, %v504
    %520 = vrot.lane.b32.xlu0 %v517, 96
    %v521 = vpop.permute.xlu0 %520
    %v523 = vmul.f32 %v518, %v521
    %v524 = vrot.slane %v418, 7
    %v526 = vmul.f32 %v504, %v524
    %v527 = vadd.f32 %v523, %v526
    %v529 = vrot.slane %v527, 2
    %530 = vrot.lane.b32.xlu0 %v529, 96
    %v531 = vpop.permute.xlu0 %530
    %v532 = vsel %vm116, %v531, 0
    %534 = vmatprep.subr.mxu0 0.0
    %535 = vmatpush1.msra.mxu0 0.0
    %536 = vmatprep.subr.mxu0 0.0
    %537 = vmatpush1.msra.mxu0 0.0
    %538 = vmatprep.subr.mxu0 0.0
    %539 = vmatpush1.msra.mxu0 0.0
    %540 = vmatprep.subr.mxu0 0.0
    %541 = vmatpush1.msra.mxu0 0.0
    %542 = vmatprep.subr.mxu0 0.0
    %543 = vmatpush1.msra.mxu0 0.0
    %544 = vmatprep.subr.mxu0 0.0
    %545 = vmatpush1.msra.mxu0 0.0
    %546 = vmatprep.subr.mxu0 0.0
    %547 = vmatpush1.msra.mxu0 0.0
    %548 = vmatprep.subr.mxu0 0.0
    %549 = vmatpush1.msra.mxu0 0.0
    %550 = vmatprep.subr.mxu0 0.0
    %551 = vmatpush1.msra.mxu0 0.0
    %552 = vmatprep.subr.mxu0 0.0
    %553 = vmatpush1.msra.mxu0 0.0
    %554 = vmatprep.subr.mxu0 0.0
    %555 = vmatpush1.msra.mxu0 0.0
    %556 = vmatprep.subr.mxu0 0.0
    %557 = vmatpush1.msra.mxu0 0.0
    %558 = vmatprep.subr.mxu0 0.0
    %559 = vmatpush1.msra.mxu0 %v193
    %560 = vmatprep.subr.mxu0 0.0
    %561 = vmatpush1.msra.mxu0 %v192
    %562 = vmatprep.subr.mxu0 0.0
    %563 = vmatpush1.msra.mxu0 %v191
    %564 = vmatprep.subr.mxu0 0.0
    %565 = vmatpush1.msra.mxu0 %v190
    %566 = vmatprep.subr.mxu0 0.0
    %567 = vmatpush2.msra.mxu0 0.0
    %568 = vmatprep.subr.mxu0 0.0
    %569 = vmatpush2.msra.mxu0 0.0
    %570 = vmatprep.subr.mxu0 0.0
    %571 = vmatpush2.msra.mxu0 0.0
    %572 = vmatprep.subr.mxu0 0.0
    %573 = vmatpush2.msra.mxu0 0.0
    %574 = vmatprep.subr.mxu0 0.0
    %575 = vmatpush2.msra.mxu0 0.0
    %576 = vmatprep.subr.mxu0 0.0
    %577 = vmatpush2.msra.mxu0 0.0
    %578 = vmatprep.subr.mxu0 0.0
    %579 = vmatpush2.msra.mxu0 0.0
    %580 = vmatprep.subr.mxu0 0.0
    %581 = vmatpush2.msra.mxu0 0.0
    %582 = vmatprep.subr.mxu0 0.0
    %583 = vmatpush2.msra.mxu0 0.0
    %584 = vmatprep.subr.mxu0 0.0
    %585 = vmatpush2.msra.mxu0 0.0
    %586 = vmatprep.subr.mxu0 0.0
    %587 = vmatpush2.msra.mxu0 0.0
    %588 = vmatprep.subr.mxu0 0.0
    %589 = vmatpush2.msra.mxu0 0.0
    %590 = vmatprep.subr.mxu0 0.0
    %591 = vmatpush2.msra.mxu0 0.0
    %592 = vmatprep.subr.mxu0 0.0
    %593 = vmatpush2.msra.mxu0 0.0
    %594 = vmatprep.subr.mxu0 0.0
    %595 = vmatpush2.msra.mxu0 0.0
    %596 = vmatprep.subr.mxu0 0.0
    %597 = vmatpush2.msra.mxu0 0.0
    %598 = vmatprep.mubr.f32.mxu0 0.0
    %599 = vmatmul.mubr.f32.gmra.mxu0 %v532
    %v600 = vpop.f32.mrf.mxu0
    %v601 = vadd.f32 0.0, %v600
    %v602 = vpop.f32.mrf.mxu0
    %603 = vdwg.mxu0
    %v605 = vrot.slane %v601, 5
    %v607 = vadd.f32 %v187, %v605
    %v608 = vxor.u32 %v607, 2147483648
    %v609 = vmul.f32 %v608, 1.442695
    %v610 = vpow.pop %v609
    %v611 = vadd.f32 %v610, 1.0
    %v612 = vrcp.pop %v611
    %v613 = vmul.f32 1.0, %v612
    %v614 = vadd.f32 %v601, %v282
    %v616 = vrot.slane %v614, 5
    %617 = vrot.lane.b32.xlu0 %v616, 64
    %v618 = vpop.permute.xlu0 %617
    %v620 = vmul.f32 %v613, %v618
    %622 = vrot.lane.b32.xlu0 %v620, 64
    %v623 = vpop.permute.xlu0 %622
    %v625 = vadd.f32 %v187, %v623
    %v626 = vtanh.pop %v625
    %v627 = vsub.f32 1.0, %v613
    %629 = vrot.lane.b32.xlu0 %v626, 96
    %v630 = vpop.permute.xlu0 %629
    %v632 = vmul.f32 %v627, %v630
    %v633 = vrot.slane %v527, 7
    %v635 = vmul.f32 %v613, %v633
    %v636 = vadd.f32 %v632, %v635
    %v638 = vrot.slane %v636, 3
    %639 = vrot.lane.b32.xlu0 %v638, 96
    %v640 = vpop.permute.xlu0 %639
    %v641 = vsel %vm116, %v640, 0
    %643 = vmatprep.subr.mxu0 0.0
    %644 = vmatpush1.msra.mxu0 0.0
    %645 = vmatprep.subr.mxu0 0.0
    %646 = vmatpush1.msra.mxu0 0.0
    %647 = vmatprep.subr.mxu0 0.0
    %648 = vmatpush1.msra.mxu0 0.0
    %649 = vmatprep.subr.mxu0 0.0
    %650 = vmatpush1.msra.mxu0 0.0
    %651 = vmatprep.subr.mxu0 0.0
    %652 = vmatpush1.msra.mxu0 0.0
    %653 = vmatprep.subr.mxu0 0.0
    %654 = vmatpush1.msra.mxu0 0.0
    %655 = vmatprep.subr.mxu0 0.0
    %656 = vmatpush1.msra.mxu0 0.0
    %657 = vmatprep.subr.mxu0 0.0
    %658 = vmatpush1.msra.mxu0 0.0
    %659 = vmatprep.subr.mxu0 0.0
    %660 = vmatpush1.msra.mxu0 0.0
    %661 = vmatprep.subr.mxu0 0.0
    %662 = vmatpush1.msra.mxu0 0.0
    %663 = vmatprep.subr.mxu0 0.0
    %664 = vmatpush1.msra.mxu0 0.0
    %665 = vmatprep.subr.mxu0 0.0
    %666 = vmatpush1.msra.mxu0 0.0
    %667 = vmatprep.subr.mxu0 0.0
    %668 = vmatpush1.msra.mxu0 %v193
    %669 = vmatprep.subr.mxu0 0.0
    %670 = vmatpush1.msra.mxu0 %v192
    %671 = vmatprep.subr.mxu0 0.0
    %672 = vmatpush1.msra.mxu0 %v191
    %673 = vmatprep.subr.mxu0 0.0
    %674 = vmatpush1.msra.mxu0 %v190
    %675 = vmatprep.subr.mxu0 0.0
    %676 = vmatpush2.msra.mxu0 0.0
    %677 = vmatprep.subr.mxu0 0.0
    %678 = vmatpush2.msra.mxu0 0.0
    %679 = vmatprep.subr.mxu0 0.0
    %680 = vmatpush2.msra.mxu0 0.0
    %681 = vmatprep.subr.mxu0 0.0
    %682 = vmatpush2.msra.mxu0 0.0
    %683 = vmatprep.subr.mxu0 0.0
    %684 = vmatpush2.msra.mxu0 0.0
    %685 = vmatprep.subr.mxu0 0.0
    %686 = vmatpush2.msra.mxu0 0.0
    %687 = vmatprep.subr.mxu0 0.0
    %688 = vmatpush2.msra.mxu0 0.0
    %689 = vmatprep.subr.mxu0 0.0
    %690 = vmatpush2.msra.mxu0 0.0
    %691 = vmatprep.subr.mxu0 0.0
    %692 = vmatpush2.msra.mxu0 0.0
    %693 = vmatprep.subr.mxu0 0.0
    %694 = vmatpush2.msra.mxu0 0.0
    %695 = vmatprep.subr.mxu0 0.0
    %696 = vmatpush2.msra.mxu0 0.0
    %697 = vmatprep.subr.mxu0 0.0
    %698 = vmatpush2.msra.mxu0 0.0
    %699 = vmatprep.subr.mxu0 0.0
    %700 = vmatpush2.msra.mxu0 0.0
    %701 = vmatprep.subr.mxu0 0.0
    %702 = vmatpush2.msra.mxu0 0.0
    %703 = vmatprep.subr.mxu0 0.0
    %704 = vmatpush2.msra.mxu0 0.0
    %705 = vmatprep.subr.mxu0 0.0
    %706 = vmatpush2.msra.mxu0 0.0
    %707 = vmatprep.mubr.f32.mxu0 0.0
    %708 = vmatmul.mubr.f32.gmra.mxu0 %v641
    %v709 = vpop.f32.mrf.mxu0
    %v710 = vadd.f32 0.0, %v709
    %v711 = vpop.f32.mrf.mxu0
    %712 = vdwg.mxu0
    %v714 = vrot.slane %v710, 4
    %v716 = vadd.f32 %v187, %v714
    %v717 = vxor.u32 %v716, 2147483648
    %v718 = vmul.f32 %v717, 1.442695
    %v719 = vpow.pop %v718
    %v720 = vadd.f32 %v719, 1.0
    %v721 = vrcp.pop %v720
    %v722 = vmul.f32 1.0, %v721
    %v723 = vadd.f32 %v710, %v282
    %v725 = vrot.slane %v723, 4
    %726 = vrot.lane.b32.xlu0 %v725, 64
    %v727 = vpop.permute.xlu0 %726
    %v729 = vmul.f32 %v722, %v727
    %731 = vrot.lane.b32.xlu0 %v729, 64
    %v732 = vpop.permute.xlu0 %731
    %v734 = vadd.f32 %v187, %v732
    %v735 = vtanh.pop %v734
    %v736 = vsub.f32 1.0, %v722
    %738 = vrot.lane.b32.xlu0 %v735, 96
    %v739 = vpop.permute.xlu0 %738
    %v741 = vmul.f32 %v736, %v739
    %v742 = vrot.slane %v636, 7
    %v744 = vmul.f32 %v722, %v742
    %v745 = vadd.f32 %v741, %v744
    %v747 = vrot.slane %v745, 4
    %748 = vrot.lane.b32.xlu0 %v747, 96
    %v749 = vpop.permute.xlu0 %748
    %v750 = vsel %vm116, %v749, 0
    %752 = vmatprep.subr.mxu0 0.0
    %753 = vmatpush1.msra.mxu0 0.0
    %754 = vmatprep.subr.mxu0 0.0
    %755 = vmatpush1.msra.mxu0 0.0
    %756 = vmatprep.subr.mxu0 0.0
    %757 = vmatpush1.msra.mxu0 0.0
    %758 = vmatprep.subr.mxu0 0.0
    %759 = vmatpush1.msra.mxu0 0.0
    %760 = vmatprep.subr.mxu0 0.0
    %761 = vmatpush1.msra.mxu0 0.0
    %762 = vmatprep.subr.mxu0 0.0
    %763 = vmatpush1.msra.mxu0 0.0
    %764 = vmatprep.subr.mxu0 0.0
    %765 = vmatpush1.msra.mxu0 0.0
    %766 = vmatprep.subr.mxu0 0.0
    %767 = vmatpush1.msra.mxu0 0.0
    %768 = vmatprep.subr.mxu0 0.0
    %769 = vmatpush1.msra.mxu0 0.0
    %770 = vmatprep.subr.mxu0 0.0
    %771 = vmatpush1.msra.mxu0 0.0
    %772 = vmatprep.subr.mxu0 0.0
    %773 = vmatpush1.msra.mxu0 0.0
    %774 = vmatprep.subr.mxu0 0.0
    %775 = vmatpush1.msra.mxu0 0.0
    %776 = vmatprep.subr.mxu0 0.0
    %777 = vmatpush1.msra.mxu0 %v193
    %778 = vmatprep.subr.mxu0 0.0
    %779 = vmatpush1.msra.mxu0 %v192
    %780 = vmatprep.subr.mxu0 0.0
    %781 = vmatpush1.msra.mxu0 %v191
    %782 = vmatprep.subr.mxu0 0.0
    %783 = vmatpush1.msra.mxu0 %v190
    %784 = vmatprep.subr.mxu0 0.0
    %785 = vmatpush2.msra.mxu0 0.0
    %786 = vmatprep.subr.mxu0 0.0
    %787 = vmatpush2.msra.mxu0 0.0
    %788 = vmatprep.subr.mxu0 0.0
    %789 = vmatpush2.msra.mxu0 0.0
    %790 = vmatprep.subr.mxu0 0.0
    %791 = vmatpush2.msra.mxu0 0.0
    %792 = vmatprep.subr.mxu0 0.0
    %793 = vmatpush2.msra.mxu0 0.0
    %794 = vmatprep.subr.mxu0 0.0
    %795 = vmatpush2.msra.mxu0 0.0
    %796 = vmatprep.subr.mxu0 0.0
    %797 = vmatpush2.msra.mxu0 0.0
    %798 = vmatprep.subr.mxu0 0.0
    %799 = vmatpush2.msra.mxu0 0.0
    %800 = vmatprep.subr.mxu0 0.0
    %801 = vmatpush2.msra.mxu0 0.0
    %802 = vmatprep.subr.mxu0 0.0
    %803 = vmatpush2.msra.mxu0 0.0
    %804 = vmatprep.subr.mxu0 0.0
    %805 = vmatpush2.msra.mxu0 0.0
    %806 = vmatprep.subr.mxu0 0.0
    %807 = vmatpush2.msra.mxu0 0.0
    %808 = vmatprep.subr.mxu0 0.0
    %809 = vmatpush2.msra.mxu0 0.0
    %810 = vmatprep.subr.mxu0 0.0
    %811 = vmatpush2.msra.mxu0 0.0
    %812 = vmatprep.subr.mxu0 0.0
    %813 = vmatpush2.msra.mxu0 0.0
    %814 = vmatprep.subr.mxu0 0.0
    %815 = vmatpush2.msra.mxu0 0.0
    %816 = vmatprep.mubr.f32.mxu0 0.0
    %817 = vmatmul.mubr.f32.gmra.mxu0 %v750
    %v818 = vpop.f32.mrf.mxu0
    %v819 = vadd.f32 0.0, %v818
    %v820 = vpop.f32.mrf.mxu0
    %821 = vdwg.mxu0
    %v823 = vrot.slane %v819, 3
    %v825 = vadd.f32 %v187, %v823
    %v826 = vxor.u32 %v825, 2147483648
    %v827 = vmul.f32 %v826, 1.442695
    %v828 = vpow.pop %v827
    %v829 = vadd.f32 %v828, 1.0
    %v830 = vrcp.pop %v829
    %v831 = vmul.f32 1.0, %v830
    %v832 = vadd.f32 %v819, %v282
    %v834 = vrot.slane %v832, 3
    %835 = vrot.lane.b32.xlu0 %v834, 64
    %v836 = vpop.permute.xlu0 %835
    %v838 = vmul.f32 %v831, %v836
    %840 = vrot.lane.b32.xlu0 %v838, 64
    %v841 = vpop.permute.xlu0 %840
    %v843 = vadd.f32 %v187, %v841
    %v844 = vtanh.pop %v843
    %v845 = vsub.f32 1.0, %v831
    %847 = vrot.lane.b32.xlu0 %v844, 96
    %v848 = vpop.permute.xlu0 %847
    %v850 = vmul.f32 %v845, %v848
    %v851 = vrot.slane %v745, 7
    %v853 = vmul.f32 %v831, %v851
    %v854 = vadd.f32 %v850, %v853
    %v855 = vsel %vm95, %v310, %v418
    %v856 = vsel %vm97, %v855, %v527
    %v857 = vsel %vm99, %v856, %v636
    %v858 = vsel %vm101, %v857, %v745
    %v859 = vsel %vm103, %v858, %v854
    %v860 = vld [vmem:[%s9] sm:$0xff]
    %v861 = vld [vmem:[%s9 + $0x8] sm:$0xff]
    %v862 = vld [vmem:[%s9 + $0x10] sm:$0xff]
    %v863 = vld [vmem:[%s9 + $0x18] sm:$0xff]
    %v864 = vld [vmem:[%s3] sm:$0xff]
    %v865 = vld [vmem:[%s3 + $0x8] sm:$0xff]
    %v866 = vld [vmem:[%s3 + $0x10] sm:$0xff]
    %v867 = vld [vmem:[%s3 + $0x18] sm:$0xff]
    %v869 = vsel %vm116, %v860, 0
    %v872 = vsel %vm116, %v861, 0
    %v875 = vsel %vm116, %v862, 0
    %v878 = vsel %vm116, %v863, 0
    %880 = vmatprep.subr.mxu0 0.0
    %881 = vmatpush1.msra.mxu0 0.0
    %882 = vmatprep.subr.mxu0 0.0
    %883 = vmatpush1.msra.mxu0 0.0
    %884 = vmatprep.subr.mxu0 0.0
    %885 = vmatpush1.msra.mxu0 0.0
    %886 = vmatprep.subr.mxu0 0.0
    %887 = vmatpush1.msra.mxu0 0.0
    %888 = vmatprep.subr.mxu0 0.0
    %889 = vmatpush1.msra.mxu0 0.0
    %890 = vmatprep.subr.mxu0 0.0
    %891 = vmatpush1.msra.mxu0 0.0
    %892 = vmatprep.subr.mxu0 0.0
    %893 = vmatpush1.msra.mxu0 0.0
    %894 = vmatprep.subr.mxu0 0.0
    %895 = vmatpush1.msra.mxu0 0.0
    %896 = vmatprep.subr.mxu0 0.0
    %897 = vmatpush1.msra.mxu0 0.0
    %898 = vmatprep.subr.mxu0 0.0
    %899 = vmatpush1.msra.mxu0 0.0
    %900 = vmatprep.subr.mxu0 0.0
    %901 = vmatpush1.msra.mxu0 0.0
    %902 = vmatprep.subr.mxu0 0.0
    %903 = vmatpush1.msra.mxu0 0.0
    %904 = vmatprep.subr.mxu0 0.0
    %905 = vmatpush1.msra.mxu0 %v867
    %906 = vmatprep.subr.mxu0 0.0
    %907 = vmatpush1.msra.mxu0 %v866
    %908 = vmatprep.subr.mxu0 0.0
    %909 = vmatpush1.msra.mxu0 %v865
    %910 = vmatprep.subr.mxu0 0.0
    %911 = vmatpush1.msra.mxu0 %v864
    %912 = vmatprep.subr.mxu0 0.0
    %913 = vmatpush2.msra.mxu0 0.0
    %914 = vmatprep.subr.mxu0 0.0
    %915 = vmatpush2.msra.mxu0 0.0
    %916 = vmatprep.subr.mxu0 0.0
    %917 = vmatpush2.msra.mxu0 0.0
    %918 = vmatprep.subr.mxu0 0.0
    %919 = vmatpush2.msra.mxu0 0.0
    %920 = vmatprep.subr.mxu0 0.0
    %921 = vmatpush2.msra.mxu0 0.0
    %922 = vmatprep.subr.mxu0 0.0
    %923 = vmatpush2.msra.mxu0 0.0
    %924 = vmatprep.subr.mxu0 0.0
    %925 = vmatpush2.msra.mxu0 0.0
    %926 = vmatprep.subr.mxu0 0.0
    %927 = vmatpush2.msra.mxu0 0.0
    %928 = vmatprep.subr.mxu0 0.0
    %929 = vmatpush2.msra.mxu0 0.0
    %930 = vmatprep.subr.mxu0 0.0
    %931 = vmatpush2.msra.mxu0 0.0
    %932 = vmatprep.subr.mxu0 0.0
    %933 = vmatpush2.msra.mxu0 0.0
    %934 = vmatprep.subr.mxu0 0.0
    %935 = vmatpush2.msra.mxu0 0.0
    %936 = vmatprep.subr.mxu0 0.0
    %937 = vmatpush2.msra.mxu0 0.0
    %938 = vmatprep.subr.mxu0 0.0
    %939 = vmatpush2.msra.mxu0 0.0
    %940 = vmatprep.subr.mxu0 0.0
    %941 = vmatpush2.msra.mxu0 0.0
    %942 = vmatprep.subr.mxu0 0.0
    %943 = vmatpush2.msra.mxu0 0.0
    %944 = vmatprep.mubr.f32.mxu0 0.0
    %945 = vmatmul.mubr.f32.gmra.mxu0 %v869
    %v946 = vpop.f32.mrf.mxu0
    %v947 = vadd.f32 0.0, %v946
    %v948 = vpop.f32.mrf.mxu0
    %949 = vmatprep.mubr.f32.mxu0 0.0
    %950 = vmatmul.mubr.f32.gmra.mxu0 %v872
    %v951 = vpop.f32.mrf.mxu0
    %v952 = vadd.f32 0.0, %v951
    %v953 = vpop.f32.mrf.mxu0
    %954 = vmatprep.mubr.f32.mxu0 0.0
    %955 = vmatmul.mubr.f32.gmra.mxu0 %v875
    %v956 = vpop.f32.mrf.mxu0
    %v957 = vadd.f32 0.0, %v956
    %v958 = vpop.f32.mrf.mxu0
    %959 = vmatprep.mubr.f32.mxu0 0.0
    %960 = vmatmul.mubr.f32.gmra.mxu0 %v878
    %v961 = vpop.f32.mrf.mxu0
    %v962 = vadd.f32 0.0, %v961
    %v963 = vpop.f32.mrf.mxu0
    %964 = vdwg.mxu0
    %966 = vrot.lane.b32.xlu0 %v859, 96
    %v967 = vpop.permute.xlu0 %966
    %v968 = vsel %vm116, %v967, 0
    %970 = vmatprep.subr.mxu0 0.0
    %971 = vmatpush1.msra.mxu0 0.0
    %972 = vmatprep.subr.mxu0 0.0
    %973 = vmatpush1.msra.mxu0 0.0
    %974 = vmatprep.subr.mxu0 0.0
    %975 = vmatpush1.msra.mxu0 0.0
    %976 = vmatprep.subr.mxu0 0.0
    %977 = vmatpush1.msra.mxu0 0.0
    %978 = vmatprep.subr.mxu0 0.0
    %979 = vmatpush1.msra.mxu0 0.0
    %980 = vmatprep.subr.mxu0 0.0
    %981 = vmatpush1.msra.mxu0 0.0
    %982 = vmatprep.subr.mxu0 0.0
    %983 = vmatpush1.msra.mxu0 0.0
    %984 = vmatprep.subr.mxu0 0.0
    %985 = vmatpush1.msra.mxu0 0.0
    %986 = vmatprep.subr.mxu0 0.0
    %987 = vmatpush1.msra.mxu0 0.0
    %988 = vmatprep.subr.mxu0 0.0
    %989 = vmatpush1.msra.mxu0 0.0
    %990 = vmatprep.subr.mxu0 0.0
    %991 = vmatpush1.msra.mxu0 0.0
    %992 = vmatprep.subr.mxu0 0.0
    %993 = vmatpush1.msra.mxu0 0.0
    %994 = vmatprep.subr.mxu0 0.0
    %995 = vmatpush1.msra.mxu0 %v962
    %996 = vmatprep.subr.mxu0 0.0
    %997 = vmatpush1.msra.mxu0 %v957
    %998 = vmatprep.subr.mxu0 0.0
    %999 = vmatpush1.msra.mxu0 %v952
    %1000 = vmatprep.subr.mxu0 0.0
    %1001 = vmatpush1.msra.mxu0 %v947
    %1002 = vmatprep.subr.mxu0 0.0
    %1003 = vmatpush2.msra.mxu0 0.0
    %1004 = vmatprep.subr.mxu0 0.0
    %1005 = vmatpush2.msra.mxu0 0.0
    %1006 = vmatprep.subr.mxu0 0.0
    %1007 = vmatpush2.msra.mxu0 0.0
    %1008 = vmatprep.subr.mxu0 0.0
    %1009 = vmatpush2.msra.mxu0 0.0
    %1010 = vmatprep.subr.mxu0 0.0
    %1011 = vmatpush2.msra.mxu0 0.0
    %1012 = vmatprep.subr.mxu0 0.0
    %1013 = vmatpush2.msra.mxu0 0.0
    %1014 = vmatprep.subr.mxu0 0.0
    %1015 = vmatpush2.msra.mxu0 0.0
    %1016 = vmatprep.subr.mxu0 0.0
    %1017 = vmatpush2.msra.mxu0 0.0
    %1018 = vmatprep.subr.mxu0 0.0
    %1019 = vmatpush2.msra.mxu0 0.0
    %1020 = vmatprep.subr.mxu0 0.0
    %1021 = vmatpush2.msra.mxu0 0.0
    %1022 = vmatprep.subr.mxu0 0.0
    %1023 = vmatpush2.msra.mxu0 0.0
    %1024 = vmatprep.subr.mxu0 0.0
    %1025 = vmatpush2.msra.mxu0 0.0
    %1026 = vmatprep.subr.mxu0 0.0
    %1027 = vmatpush2.msra.mxu0 0.0
    %1028 = vmatprep.subr.mxu0 0.0
    %1029 = vmatpush2.msra.mxu0 0.0
    %1030 = vmatprep.subr.mxu0 0.0
    %1031 = vmatpush2.msra.mxu0 0.0
    %1032 = vmatprep.subr.mxu0 0.0
    %1033 = vmatpush2.msra.mxu0 0.0
    %1034 = vmatprep.mubr.f32.mxu0 0.0
    %1035 = vmatmul.mubr.f32.gmra.mxu0 %v968
    %v1036 = vpop.f32.mrf.mxu0
    %v1037 = vadd.f32 0.0, %v1036
    %v1038 = vpop.f32.mrf.mxu0
    %1039 = vdwg.mxu0
    %vm1040 = vcmask 62464
    %v1041 = vsel %vm1040, %v1037, -inf
    %1042 = vmax.xlane.f32.xlu0 %v1041
    %v1043 = vpop.xlane.xlu0 %1042
    %v1044 = vsub.f32 %v1037, %v1043
    %v1045 = vmul.f32 %v1044, 1.442695
    %v1046 = vpow.pop %v1045
    %v1047 = vsel %vm1040, %v1046, 0.0
    %1048 = vadd.xlane.f32.xlu0 %v1047
    %v1049 = vpop.xlane.xlu0 %1048
    %v1050 = vrcp.pop %v1049
    %v1051 = vmul.f32 %v1046, %v1050
    %v1052 = vld [vmem:[%s2] sm:$0xff]
    %v1053 = vld [vmem:[#allocation4] sm:$0xff]
    %v1054 = vld [vmem:[#allocation4 + $0x8] sm:$0xff]
    %v1055 = vld [vmem:[#allocation4 + $0x10] sm:$0xff]
    %v1056 = vld [vmem:[#allocation4 + $0x18] sm:$0xff]
    %v1058 = vsel %vm116, %v1052, 0
    %1060 = vmatprep.subr.mxu0 0.0
    %1061 = vmatpush1.msra.mxu0 0.0
    %1062 = vmatprep.subr.mxu0 0.0
    %1063 = vmatpush1.msra.mxu0 0.0
    %1064 = vmatprep.subr.mxu0 0.0
    %1065 = vmatpush1.msra.mxu0 0.0
    %1066 = vmatprep.subr.mxu0 0.0
    %1067 = vmatpush1.msra.mxu0 0.0
    %1068 = vmatprep.subr.mxu0 0.0
    %1069 = vmatpush1.msra.mxu0 0.0
    %1070 = vmatprep.subr.mxu0 0.0
    %1071 = vmatpush1.msra.mxu0 0.0
    %1072 = vmatprep.subr.mxu0 0.0
    %1073 = vmatpush1.msra.mxu0 0.0
    %1074 = vmatprep.subr.mxu0 0.0
    %1075 = vmatpush1.msra.mxu0 0.0
    %1076 = vmatprep.subr.mxu0 0.0
    %1077 = vmatpush1.msra.mxu0 0.0
    %1078 = vmatprep.subr.mxu0 0.0
    %1079 = vmatpush1.msra.mxu0 0.0
    %1080 = vmatprep.subr.mxu0 0.0
    %1081 = vmatpush1.msra.mxu0 0.0
    %1082 = vmatprep.subr.mxu0 0.0
    %1083 = vmatpush1.msra.mxu0 0.0
    %1084 = vmatprep.subr.mxu0 0.0
    %1085 = vmatpush1.msra.mxu0 %v1056
    %1086 = vmatprep.subr.mxu0 0.0
    %1087 = vmatpush1.msra.mxu0 %v1055
    %1088 = vmatprep.subr.mxu0 0.0
    %1089 = vmatpush1.msra.mxu0 %v1054
    %1090 = vmatprep.subr.mxu0 0.0
    %1091 = vmatpush1.msra.mxu0 %v1053
    %1092 = vmatprep.subr.mxu0 0.0
    %1093 = vmatpush2.msra.mxu0 0.0
    %1094 = vmatprep.subr.mxu0 0.0
    %1095 = vmatpush2.msra.mxu0 0.0
    %1096 = vmatprep.subr.mxu0 0.0
    %1097 = vmatpush2.msra.mxu0 0.0
    %1098 = vmatprep.subr.mxu0 0.0
    %1099 = vmatpush2.msra.mxu0 0.0
    %1100 = vmatprep.subr.mxu0 0.0
    %1101 = vmatpush2.msra.mxu0 0.0
    %1102 = vmatprep.subr.mxu0 0.0
    %1103 = vmatpush2.msra.mxu0 0.0
    %1104 = vmatprep.subr.mxu0 0.0
    %1105 = vmatpush2.msra.mxu0 0.0
    %1106 = vmatprep.subr.mxu0 0.0
    %1107 = vmatpush2.msra.mxu0 0.0
    %1108 = vmatprep.subr.mxu0 0.0
    %1109 = vmatpush2.msra.mxu0 0.0
    %1110 = vmatprep.subr.mxu0 0.0
    %1111 = vmatpush2.msra.mxu0 0.0
    %1112 = vmatprep.subr.mxu0 0.0
    %1113 = vmatpush2.msra.mxu0 0.0
    %1114 = vmatprep.subr.mxu0 0.0
    %1115 = vmatpush2.msra.mxu0 0.0
    %1116 = vmatprep.subr.mxu0 0.0
    %1117 = vmatpush2.msra.mxu0 0.0
    %1118 = vmatprep.subr.mxu0 0.0
    %1119 = vmatpush2.msra.mxu0 0.0
    %1120 = vmatprep.subr.mxu0 0.0
    %1121 = vmatpush2.msra.mxu0 0.0
    %1122 = vmatprep.subr.mxu0 0.0
    %1123 = vmatpush2.msra.mxu0 0.0
    %1124 = vmatprep.mubr.f32.mxu0 0.0
    %1125 = vmatmul.mubr.f32.gmra.mxu0 %v1058
    %v1126 = vpop.f32.mrf.mxu0
    %v1127 = vadd.f32 0.0, %v1126
    %v1128 = vpop.f32.mrf.mxu0
    %1129 = vdwg.mxu0
    %v1130 = vld [vmem:[%s10] sm:$0xff]
    %v1131 = vld [vmem:[%s10 + $0x8] sm:$0xff]
    %v1132 = vld [vmem:[%s10 + $0x10] sm:$0xff]
    %v1133 = vld [vmem:[%s10 + $0x18] sm:$0xff]
    %vm1134 = vcmask 64512
    %v1136 = vsel %vm1134, %v1051, 0
    %1138 = vmatprep.subr.mxu0 0.0
    %1139 = vmatpush1.msra.mxu0 0.0
    %1140 = vmatprep.subr.mxu0 0.0
    %1141 = vmatpush1.msra.mxu0 0.0
    %1142 = vmatprep.subr.mxu0 0.0
    %1143 = vmatpush1.msra.mxu0 0.0
    %1144 = vmatprep.subr.mxu0 0.0
    %1145 = vmatpush1.msra.mxu0 0.0
    %1146 = vmatprep.subr.mxu0 0.0
    %1147 = vmatpush1.msra.mxu0 0.0
    %1148 = vmatprep.subr.mxu0 0.0
    %1149 = vmatpush1.msra.mxu0 0.0
    %1150 = vmatprep.subr.mxu0 0.0
    %1151 = vmatpush1.msra.mxu0 0.0
    %1152 = vmatprep.subr.mxu0 0.0
    %1153 = vmatpush1.msra.mxu0 0.0
    %1154 = vmatprep.subr.mxu0 0.0
    %1155 = vmatpush1.msra.mxu0 0.0
    %1156 = vmatprep.subr.mxu0 0.0
    %1157 = vmatpush1.msra.mxu0 0.0
    %1158 = vmatprep.subr.mxu0 0.0
    %1159 = vmatpush1.msra.mxu0 0.0
    %1160 = vmatprep.subr.mxu0 0.0
    %1161 = vmatpush1.msra.mxu0 0.0
    %1162 = vmatprep.subr.mxu0 0.0
    %1163 = vmatpush1.msra.mxu0 0.0
    %1164 = vmatprep.subr.mxu0 0.0
    %1165 = vmatpush1.msra.mxu0 0.0
    %1166 = vmatprep.subr.mxu0 0.0
    %1167 = vmatpush1.msra.mxu0 0.0
    %1168 = vmatprep.subr.mxu0 0.0
    %1169 = vmatpush1.msra.mxu0 %v1127
    %1170 = vmatprep.subr.mxu0 0.0
    %1171 = vmatpush2.msra.mxu0 0.0
    %1172 = vmatprep.subr.mxu0 0.0
    %1173 = vmatpush2.msra.mxu0 0.0
    %1174 = vmatprep.subr.mxu0 0.0
    %1175 = vmatpush2.msra.mxu0 0.0
    %1176 = vmatprep.subr.mxu0 0.0
    %1177 = vmatpush2.msra.mxu0 0.0
    %1178 = vmatprep.subr.mxu0 0.0
    %1179 = vmatpush2.msra.mxu0 0.0
    %1180 = vmatprep.subr.mxu0 0.0
    %1181 = vmatpush2.msra.mxu0 0.0
    %1182 = vmatprep.subr.mxu0 0.0
    %1183 = vmatpush2.msra.mxu0 0.0
    %1184 = vmatprep.subr.mxu0 0.0
    %1185 = vmatpush2.msra.mxu0 0.0
    %1186 = vmatprep.subr.mxu0 0.0
    %1187 = vmatpush2.msra.mxu0 0.0
    %1188 = vmatprep.subr.mxu0 0.0
    %1189 = vmatpush2.msra.mxu0 0.0
    %1190 = vmatprep.subr.mxu0 0.0
    %1191 = vmatpush2.msra.mxu0 0.0
    %1192 = vmatprep.subr.mxu0 0.0
    %1193 = vmatpush2.msra.mxu0 0.0
    %1194 = vmatprep.subr.mxu0 0.0
    %1195 = vmatpush2.msra.mxu0 0.0
    %1196 = vmatprep.subr.mxu0 0.0
    %1197 = vmatpush2.msra.mxu0 0.0
    %1198 = vmatprep.subr.mxu0 0.0
    %1199 = vmatpush2.msra.mxu0 0.0
    %1200 = vmatprep.subr.mxu0 0.0
    %1201 = vmatpush2.msra.mxu0 0.0
    %1202 = vmatprep.mubr.f32.mxu0 0.0
    %1203 = vmatmul.mubr.f32.gmra.mxu0 %v1136
    %v1204 = vpop.f32.mrf.mxu0
    %v1205 = vadd.f32 0.0, %v1204
    %v1206 = vpop.f32.mrf.mxu0
    %1207 = vdwg.mxu0
    %1208 = vmatprep.subr.mxu0 0.0
    %1209 = vmatpush1.msra.mxu0 0.0
    %1210 = vmatprep.subr.mxu0 0.0
    %1211 = vmatpush1.msra.mxu0 0.0
    %1212 = vmatprep.subr.mxu0 0.0
    %1213 = vmatpush1.msra.mxu0 0.0
    %1214 = vmatprep.subr.mxu0 0.0
    %1215 = vmatpush1.msra.mxu0 0.0
    %1216 = vmatprep.subr.mxu0 0.0
    %1217 = vmatpush1.msra.mxu0 0.0
    %1218 = vmatprep.subr.mxu0 0.0
    %1219 = vmatpush1.msra.mxu0 0.0
    %1220 = vmatprep.subr.mxu0 0.0
    %1221 = vmatpush1.msra.mxu0 0.0
    %1222 = vmatprep.subr.mxu0 0.0
    %1223 = vmatpush1.msra.mxu0 0.0
    %1224 = vmatprep.subr.mxu0 0.0
    %1225 = vmatpush1.msra.mxu0 0.0
    %1226 = vmatprep.subr.mxu0 0.0
    %1227 = vmatpush1.msra.mxu0 0.0
    %1228 = vmatprep.subr.mxu0 0.0
    %1229 = vmatpush1.msra.mxu0 0.0
    %1230 = vmatprep.subr.mxu0 0.0
    %1231 = vmatpush1.msra.mxu0 0.0
    %1232 = vmatprep.subr.mxu0 0.0
    %1233 = vmatpush1.msra.mxu0 %v1133
    %1234 = vmatprep.subr.mxu0 0.0
    %1235 = vmatpush1.msra.mxu0 %v1132
    %1236 = vmatprep.subr.mxu0 0.0
    %1237 = vmatpush1.msra.mxu0 %v1131
    %1238 = vmatprep.subr.mxu0 0.0
    %1239 = vmatpush1.msra.mxu0 %v1130
    %1240 = vmatprep.subr.mxu0 0.0
    %1241 = vmatpush2.msra.mxu0 0.0
    %1242 = vmatprep.subr.mxu0 0.0
    %1243 = vmatpush2.msra.mxu0 0.0
    %1244 = vmatprep.subr.mxu0 0.0
    %1245 = vmatpush2.msra.mxu0 0.0
    %1246 = vmatprep.subr.mxu0 0.0
    %1247 = vmatpush2.msra.mxu0 0.0
    %1248 = vmatprep.subr.mxu0 0.0
    %1249 = vmatpush2.msra.mxu0 0.0
    %1250 = vmatprep.subr.mxu0 0.0
    %1251 = vmatpush2.msra.mxu0 0.0
    %1252 = vmatprep.subr.mxu0 0.0
    %1253 = vmatpush2.msra.mxu0 0.0
    %1254 = vmatprep.subr.mxu0 0.0
    %1255 = vmatpush2.msra.mxu0 0.0
    %1256 = vmatprep.subr.mxu0 0.0
    %1257 = vmatpush2.msra.mxu0 0.0
    %1258 = vmatprep.subr.mxu0 0.0
    %1259 = vmatpush2.msra.mxu0 0.0
    %1260 = vmatprep.subr.mxu0 0.0
    %1261 = vmatpush2.msra.mxu0 0.0
    %1262 = vmatprep.subr.mxu0 0.0
    %1263 = vmatpush2.msra.mxu0 0.0
    %1264 = vmatprep.subr.mxu0 0.0
    %1265 = vmatpush2.msra.mxu0 0.0
    %1266 = vmatprep.subr.mxu0 0.0
    %1267 = vmatpush2.msra.mxu0 0.0
    %1268 = vmatprep.subr.mxu0 0.0
    %1269 = vmatpush2.msra.mxu0 0.0
    %1270 = vmatprep.subr.mxu0 0.0
    %1271 = vmatpush2.msra.mxu0 0.0
    %1272 = vmatprep.mubr.f32.mxu0 0.0
    %1273 = vmatmul.mubr.f32.gmra.mxu0 %v968
    %v1274 = vpop.f32.mrf.mxu0
    %v1275 = vadd.f32 %v1205, %v1274
    %v1276 = vpop.f32.mrf.mxu0
    %1277 = vdwg.mxu0
    %v1278 = vld [vmem:[%s12] sm:$0x1]
    %v1280 = vlaneseq
    %v1281 = vshrl.u32 %v1280, 7
    %v1282 = vsub.s32 0, %v1281
    %v1283 = vrot.slane %v1278, %v1282
    %v1285 = vadd.f32 %v1275, %v1283
    %vm1286 = vcmask 521216
    %v1287 = vsel %vm1286, %v1285, -inf
    %1288 = vmax.xlane.f32.xlu0 %v1287
    %v1289 = vpop.xlane.xlu0 %1288
    %v1290 = vsub.f32 %v1285, %v1289
    %v1291 = vmul.f32 %v1290, 1.442695
    %v1292 = vpow.pop %v1291
    %v1293 = vsel %vm1286, %v1292, 0.0
    %1294 = vadd.xlane.f32.xlu0 %v1293
    %v1295 = vpop.xlane.xlu0 %1294
    %v1296 = vlog2.pop %v1295
    %v1297 = vmul.f32 %v1296, 0.6931472
    %v1298 = vadd.f32 %v1289, %v1297
    %v1299 = vsub.f32 %v1285, %v1298
    %1300 = vrot.lane.b32.xlu0 %v859, 32
    %v1301 = vpop.permute.xlu0 %1300
    %1303 = vrot.lane.b32.xlu0 %v1051, 96
    %v1304 = vpop.permute.xlu0 %1303
    %vm1306 = vcmask 523264
    %v1307 = vsel %vm1306, %v1299, %v1301
    %vm1308 = vcmask 785408
    %v1309 = vsel %vm1308, %v1307, %v1304
    %vm1310 = vcmask 850944
    %v1311 = vsel %vm1310, %v1309, 0.0
    %1312 = vst [vmem:[%s13] sm:$0x3f] %v1311
    // Predicated region
    $region54: #{luong_decode.1} parent=1 // pred_check
      _
    $region55: #{luong_decode.1} parent=1 // pred_check_branch
      %1314 = sbr.rel (0) target = $region57
    $region56: #{luong_decode.1} parent=1 // pred_region
      _
    $region57: #{luong_decode.1} parent=1 // pred_fallthru
      _
    // Predicated region
    $region58: #{luong_decode.1} parent=1 // pred_check
      _
    $region59: #{luong_decode.1} parent=1 // pred_check_branch
      %1316 = sbr.rel (0) target = $region61
    $region60: #{luong_decode.1} parent=1 // pred_region
      _
    $region61: #{luong_decode.1} parent=1 // pred_fallthru
      _
    %1317 = vsyncpa [#allocation5], 1

</llo_original>
